<compile_context>
chip_gen: v7x
topology: tpu7x:2x2x1
jax: 0.10.0
libtpu: 0.0.40
codegen_flags: <defaults>
</compile_context>

<pallas_src>
import math
from functools import partial

import jax
import jax.numpy as jnp
from jax import lax
from jax.experimental import pallas as pl
from jax.experimental.pallas import tpu as pltpu


# ----------------------------- "args" config --------------------------------
RAD_MAXR = 3.0        # args.rad_maxr
RAD_NB   = 8          # args.rad_nb  (number_of_basis)
RAD_H    = 32         # args.rad_h   (hidden width of radial MLP)
RAD_L    = 1          # args.rad_L   (hidden layers; fixed to 1 here)
DEC_L    = 1          # args.dec_L   (number of middle layers)
C_IN, C_MID, C_OUT = 4, 16, 8            # scalar channel widths of Rs
CHANNELS = [C_IN] + [C_MID] * DEC_L + [C_OUT]
SCALAR_ACT = "relu"   # ACTS[args.scalar_act]


def _round_up(x, m):
    return ((x + m - 1) // m) * m


def _pick_tile(n, target, quantum):
    """Largest divisor of n that is <= target and a multiple of `quantum`;
    falls back to the full extent n (always legal for a BlockSpec dim)."""
    if n <= target:
        return n
    t = (target // quantum) * quantum
    while t >= quantum:
        if n % t == 0:
            return t
        t -= quantum
    return n


def _tpu_vmem_capacity():
    try:
        return int(pltpu.get_tpu_info().vmem_capacity_bytes)
    except Exception:
        return 64 * 1024 * 1024          # conservative (v7x per-TensorCore)


def _lane_tile_target():
    # 256 fills the v6e / v7x MXU N dimension; v5e's MXU is 128 wide.
    try:
        if "5" in str(getattr(pltpu.get_tpu_info(), "chip_version", "")):
            return 128
    except Exception:
        pass
    return 256


# ---------------- fused radial-MLP + point-conv + activation kernel ----------
def _fused_conv_kernel(gta_ref, gn_ref, v_ref, w1_ref, o_ref,
                       basis_ref, acc_ref,
                       *, nb, h, tn, ta, inv_step, act, v_slice_n):
    # gta_ref:   [1, 3, Ta]          query-point geometry tile (a on lanes) VMEM
    # gn_ref:    [1, Tn, 3]          neighbour geometry tile                VMEM
    # v_ref:     [1, h, Co, N|Tn]    v[hh,o,n] = sum_i w2[hh,o,i]*x[i,n]*norm
    # w1_ref:    [nb, h]             first radial weight (pre-scaled)       SMEM
    # o_ref:     [1, Co, Ta]         output tile (a on lanes, lane-dense)
    # basis_ref: [nb, Tn, Ta]        staged radial basis (VMEM scratch)
    # acc_ref:   [Co, Ta]            f32 accumulator over n-tiles (VMEM scratch)
    ni = pl.program_id(2)

    @pl.when(ni == 0)
    def _init():
        acc_ref[...] = jnp.zeros_like(acc_ref)

    ga = gta_ref[0]                                    # [3, Ta]
    gn = gn_ref[0]                                     # [Tn, 3]

    # Pairwise distances [Tn, Ta] (a on lanes), per-coordinate broadcast (VPU).
    d2 = None
    for d in range(3):
        diff = gn[:, d:d + 1] - ga[d:d + 1, :]         # [Tn, 1] - [1, Ta]
        dd = diff * diff
        d2 = dd if d2 is None else d2 + dd
    ru = jnp.sqrt(d2) * inv_step                       # r / step, [Tn, Ta]

    # Cosine radial basis with a single transcendental per pair:
    #   cos(pi/2*(u-k))^2 == cos^2(pi/2*u) (k even)  or  1 - cos^2 (k odd).
    c = jnp.cos((0.5 * jnp.pi) * ru)
    c2 = c * c
    for k in range(nb):
        val = c2 if (k % 2 == 0) else (1.0 - c2)
        basis_ref[k] = jnp.where(jnp.abs(ru - float(k)) < 1.0, val, 0.0)

    # Radial hidden layer (VPU, scalar weights from SMEM with 1/sqrt(nb)
    # folded in) + neighbour contraction on the MXU (K = Tn, N = Ta).
    # Dynamic hh / k indices keep the basis stack in VMEM and the live vreg
    # set small (no spill chain from a fully-unrolled nb x h FMA chain).
    @pl.loop(0, h)
    def _hh(hh):
        def k_step(k, z):
            return z + basis_ref[k] * w1_ref[k, hh]
        z = lax.fori_loop(0, nb, k_step, jnp.zeros((tn, ta), jnp.float32))
        z = jnp.maximum(z, 0.0)                        # [Tn, Ta]
        if v_slice_n:
            start = pl.multiple_of(ni * tn, 128)
            vh = v_ref[0, hh, :, pl.ds(start, tn)]     # [Co, Tn] (resident v)
        else:
            vh = v_ref[0, hh]                          # [Co, Tn]
        acc_ref[...] += jnp.dot(vh, z, preferred_element_type=jnp.float32)

    @pl.when(ni == pl.num_programs(2) - 1)
    def _finalize():
        y = acc_ref[...]
        if act == "relu":
            y = jnp.maximum(y, 0.0)
        elif act == "sigmoid":
            y = jax.nn.sigmoid(y)
        o_ref[0] = y.astype(o_ref.dtype)


def gated_block(x_cf, geometry, geometry_t, w1, w2, c_in, c_out, act):
    """One GatedBlock (scalar-only): fused radial-kernel point conv + act.

    x_cf:       [B, c_in, N]   channels-first features
    geometry:   [B, N, 3]
    geometry_t: [B, 3, N]
    returns:    [B, c_out, N]
    """
    B, N, _ = geometry.shape
    nb, h = w1.shape

    # Fold normalizations into the small operands (no per-pair work).
    w1s = w1 * (1.0 / math.sqrt(nb))
    norm = 1.0 / (math.sqrt(h) * math.sqrt(N))   # radial 1/sqrt(h) * feat 1/sqrt(N)
    # v[b, hh, o, n] = sum_i w2[hh, o, i] * x[b, i, n] * norm  (large axis last)
    v = (jnp.einsum('hoi,bin->bhon', w2.reshape(h, c_out, c_in), x_cf)
         * norm).astype(jnp.float32)

    ta = _pick_tile(N, _lane_tile_target(), 128)   # lane / MXU-N axis tile
    tn = _pick_tile(N, 128, 128)                   # reduction (K) axis tile
    n_a, n_n = N // ta, N // tn
    grid = (B, n_a, n_n)

    cap = _tpu_vmem_capacity()
    lane = lambda x: max(_round_up(x, 128), 128)
    sub = lambda x: max(_round_up(x, 8), 8)

    # Keep v VMEM-resident (one DMA per batch element) when it comfortably
    # fits; otherwise stream one [h, c_out, tn] slab per n-step.
    v_res_bytes = 2 * h * sub(c_out) * lane(N) * 4
    v_resident = v_res_bytes <= cap // 4
    if v_resident:
        v_spec = pl.BlockSpec((1, h, c_out, N), lambda b, ai, ni: (b, 0, 0, 0))
        v_bytes_hbm = B * h * c_out * N * 4
        v_block_bytes = v_res_bytes
    else:
        v_spec = pl.BlockSpec((1, h, c_out, tn), lambda b, ai, ni: (b, 0, 0, ni))
        v_bytes_hbm = B * n_a * h * c_out * N * 4      # re-streamed per a-tile
        v_block_bytes = 2 * h * sub(c_out) * lane(tn) * 4
    v_slice_n = v_resident and n_n > 1

    vmem_need = (v_block_bytes
                 + 2 * sub(3) * lane(ta) * 4           # geometry^T a-tile (x2 buf)
                 + 2 * sub(tn) * lane(3) * 4           # geometry   n-tile (x2 buf)
                 + 2 * sub(c_out) * lane(ta) * 4       # output tile       (x2 buf)
                 + nb * sub(tn) * lane(ta) * 4         # basis scratch
                 + sub(c_out) * lane(ta) * 4)          # accumulator
    vmem_limit = int(vmem_need * 1.25) + (2 << 20)
    vmem_limit = max(vmem_limit, 16 << 20)
    vmem_limit = min(vmem_limit, cap // 2)
    vmem_limit = max(vmem_limit, vmem_need + (2 << 20))

    pairs = B * N * N
    cost = pl.CostEstimate(
        flops=int(pairs * (9 + 6 * nb + 2 * nb * h + 2 * h * c_out)),
        transcendentals=int(pairs * 2),                # cos + sqrt per pair
        bytes_accessed=int(v_bytes_hbm
                           + 12 * B * N * (1 + n_a)    # g^T a-tiles + g n-tiles
                           + 4 * B * c_out * N         # output
                           + 4 * nb * h))              # w1

    kernel = partial(_fused_conv_kernel, nb=nb, h=h, tn=tn, ta=ta,
                     inv_step=(RAD_NB - 1) / RAD_MAXR, act=act,
                     v_slice_n=v_slice_n)
    out = pl.pallas_call(
        kernel,
        out_shape=jax.ShapeDtypeStruct((B, c_out, N), jnp.float32),
        grid=grid,
        in_specs=[
            pl.BlockSpec((1, 3, ta), lambda b, ai, ni: (b, 0, ai)),    # g^T (a)
            pl.BlockSpec((1, tn, 3), lambda b, ai, ni: (b, ni, 0)),    # g   (n)
            v_spec,                                                    # v
            pl.BlockSpec(memory_space=pltpu.MemorySpace.SMEM),         # w1s
        ],
        out_specs=pl.BlockSpec((1, c_out, ta), lambda b, ai, ni: (b, 0, ai)),
        scratch_shapes=[pltpu.VMEM((nb, tn, ta), jnp.float32),
                        pltpu.VMEM((c_out, ta), jnp.float32)],
        compiler_params=pltpu.CompilerParams(
            dimension_semantics=("parallel", "parallel", "arbitrary"),
            vmem_limit_bytes=int(vmem_limit)),
        cost_estimate=cost,
    )(geometry_t, geometry, v, w1s)
    return out


# ------------------------------- Decoder -------------------------------------
def init_decoder_params(key):
    params = []
    for c_in, c_out in zip(CHANNELS[:-1], CHANNELS[1:]):
        key, k1, k2 = jax.random.split(key, 3)
        w1 = jax.random.normal(k1, (RAD_NB, RAD_H), jnp.float32)
        w2 = jax.random.normal(k2, (RAD_H, c_out * c_in), jnp.float32)
        params.append((w1, w2))
    return params


def decoder_forward(params, features, geometry):
    # matches: for layer in layers: out = layer(out.div(sqrt(geometry.size(1))), geometry)
    geometry_t = jnp.swapaxes(geometry, 1, 2)          # [B, 3, N]
    x = jnp.swapaxes(features, 1, 2)                   # [B, C, N] channels-first
    for (w1, w2), (c_in, c_out) in zip(params, zip(CHANNELS[:-1], CHANNELS[1:])):
        x = gated_block(x, geometry, geometry_t, w1, w2, c_in, c_out, SCALAR_ACT)
    return jnp.swapaxes(x, 1, 2)                       # [B, N, C_out]


if __name__ == "__main__":
    B, N = 2, 8
    key = jax.random.PRNGKey(0)
    kf, kg, kp = jax.random.split(key, 3)
    features = jax.random.normal(kf, (B, N, C_IN), jnp.float32)
    geometry = jax.random.normal(kg, (B, N, 3), jnp.float32)
    params = init_decoder_params(kp)

    fwd = jax.jit(decoder_forward)
    out = fwd(params, features, geometry)
    jax.block_until_ready(out)
    assert out.shape == (B, N, C_OUT), out.shape
    assert jnp.all(jnp.isfinite(out))
    print("KERNEL_OK")
</pallas_src>

<mosaic_0001>
module attributes {stable_mosaic.version = 11 : i64} {
  func.func @_fused_conv_kernel(%arg0: i32, %arg1: i32, %arg2: i32, %arg3: memref<1x3x8xf32, #tpu.memory_space<vmem>>, %arg4: memref<1x8x3xf32, #tpu.memory_space<vmem>>, %arg5: memref<1x32x16x8xf32, #tpu.memory_space<vmem>>, %arg6: memref<8x32xf32, #tpu.memory_space<smem>>, %arg7: memref<1x16x8xf32, #tpu.memory_space<vmem>>, %arg8: memref<8x8x8xf32, #tpu.memory_space<vmem>>, %arg9: memref<16x8xf32, #tpu.memory_space<vmem>>) attributes {dimension_semantics = [#tpu.dimension_semantics<parallel>, #tpu.dimension_semantics<parallel>, #tpu.dimension_semantics<arbitrary>], iteration_bounds = array<i64: 2, 1, 1>, scalar_prefetch = 0 : i64, scratch_operands = 2 : i64, tpu.core_type = #tpu.core_type<tc>, window_params = [{transform_indices = @transform_0, window_bounds = array<i64: 1, 3, 8>}, {transform_indices = @transform_1, window_bounds = array<i64: 1, 8, 3>}, {transform_indices = @transform_2, window_bounds = array<i64: 1, 32, 16, 8>}, {transform_indices = @transform_3, window_bounds = array<i64: 8, 32>}, {transform_indices = @transform_4, window_bounds = array<i64: 1, 16, 8>}]} {
    %c0_i32 = arith.constant 0 : i32
    %0 = arith.cmpi eq, %arg2, %c0_i32 : i32
    %1 = arith.extui %0 : i1 to i32
    %c0_i32_0 = arith.constant 0 : i32
    %2 = arith.cmpi ne, %1, %c0_i32_0 : i32
    scf.if %2 {
      %cst_56 = arith.constant 0.000000e+00 : f32
      %126 = vector.broadcast %cst_56 : f32 to vector<16x8xf32>
      %c0_57 = arith.constant 0 : index
      %c0_58 = arith.constant 0 : index
      %127 = vector.load %arg9[%c0_57, %c0_58] : memref<16x8xf32, #tpu.memory_space<vmem>>, vector<16x8xf32>
      tpu.vector_store %arg9[%c0_57, %c0_58], %126 {strides = array<i32>} : memref<16x8xf32, #tpu.memory_space<vmem>>, vector<16x8xf32>,
    } else {
    }
    %c0 = arith.constant 0 : index
    %c0_1 = arith.constant 0 : index
    %c0_2 = arith.constant 0 : index
    %3 = vector.load %arg3[%c0, %c0_1, %c0_2] : memref<1x3x8xf32, #tpu.memory_space<vmem>>, vector<1x3x8xf32>
    %4 = vector.shape_cast %3 : vector<1x3x8xf32> to vector<3x8xf32>
    %c0_3 = arith.constant 0 : index
    %c0_4 = arith.constant 0 : index
    %c0_5 = arith.constant 0 : index
    %5 = vector.load %arg4[%c0_3, %c0_4, %c0_5] : memref<1x8x3xf32, #tpu.memory_space<vmem>>, vector<1x8x3xf32>
    %6 = vector.shape_cast %5 : vector<1x8x3xf32> to vector<8x3xf32>
    %7 = vector.extract_strided_slice %6 {offsets = [0, 0], sizes = [8, 1], strides = [1, 1]} : vector<8x3xf32> to vector<8x1xf32>
    %8 = vector.extract_strided_slice %4 {offsets = [0, 0], sizes = [1, 8], strides = [1, 1]} : vector<3x8xf32> to vector<1x8xf32>
    %9 = vector.broadcast %7 : vector<8x1xf32> to vector<8x8xf32>
    %10 = vector.broadcast %8 : vector<1x8xf32> to vector<8x8xf32>
    %11 = arith.subf %9, %10 : vector<8x8xf32>
    %12 = arith.mulf %11, %11 : vector<8x8xf32>
    %13 = vector.extract_strided_slice %6 {offsets = [0, 1], sizes = [8, 1], strides = [1, 1]} : vector<8x3xf32> to vector<8x1xf32>
    %14 = vector.extract_strided_slice %4 {offsets = [1, 0], sizes = [1, 8], strides = [1, 1]} : vector<3x8xf32> to vector<1x8xf32>
    %15 = vector.broadcast %13 : vector<8x1xf32> to vector<8x8xf32>
    %16 = vector.broadcast %14 : vector<1x8xf32> to vector<8x8xf32>
    %17 = arith.subf %15, %16 : vector<8x8xf32>
    %18 = arith.mulf %17, %17 : vector<8x8xf32>
    %19 = arith.addf %12, %18 : vector<8x8xf32>
    %20 = vector.extract_strided_slice %6 {offsets = [0, 2], sizes = [8, 1], strides = [1, 1]} : vector<8x3xf32> to vector<8x1xf32>
    %21 = vector.extract_strided_slice %4 {offsets = [2, 0], sizes = [1, 8], strides = [1, 1]} : vector<3x8xf32> to vector<1x8xf32>
    %22 = vector.broadcast %20 : vector<8x1xf32> to vector<8x8xf32>
    %23 = vector.broadcast %21 : vector<1x8xf32> to vector<8x8xf32>
    %24 = arith.subf %22, %23 : vector<8x8xf32>
    %25 = arith.mulf %24, %24 : vector<8x8xf32>
    %26 = arith.addf %19, %25 : vector<8x8xf32>
    %27 = math.sqrt %26 : vector<8x8xf32>
    %cst = arith.constant 2.33333325 : f32
    %28 = vector.broadcast %cst : f32 to vector<8x8xf32>
    %29 = arith.mulf %27, %28 : vector<8x8xf32>
    %cst_6 = arith.constant 1.57079637 : f32
    %30 = vector.broadcast %cst_6 : f32 to vector<8x8xf32>
    %31 = arith.mulf %30, %29 : vector<8x8xf32>
    %32 = math.cos %31 : vector<8x8xf32>
    %33 = arith.mulf %32, %32 : vector<8x8xf32>
    %cst_7 = arith.constant 0.000000e+00 : f32
    %34 = vector.broadcast %cst_7 : f32 to vector<8x8xf32>
    %35 = arith.subf %29, %34 : vector<8x8xf32>
    %36 = math.absf %35 : vector<8x8xf32>
    %cst_8 = arith.constant 1.000000e+00 : f32
    %37 = vector.broadcast %cst_8 : f32 to vector<8x8xf32>
    %38 = arith.cmpf olt, %36, %37 : vector<8x8xf32>
    %cst_9 = arith.constant 0.000000e+00 : f32
    %39 = vector.broadcast %cst_9 : f32 to vector<8x8xf32>
    %40 = arith.select %38, %33, %39 : vector<8x8xi1>, vector<8x8xf32>
    %c0_10 = arith.constant 0 : index
    %c0_11 = arith.constant 0 : index
    %c0_12 = arith.constant 0 : index
    %41 = vector.load %arg8[%c0_10, %c0_11, %c0_12] : memref<8x8x8xf32, #tpu.memory_space<vmem>>, vector<1x8x8xf32>
    %42 = vector.shape_cast %41 : vector<1x8x8xf32> to vector<8x8xf32>
    %43 = vector.shape_cast %40 : vector<8x8xf32> to vector<1x8x8xf32>
    tpu.vector_store %arg8[%c0_10, %c0_11, %c0_12], %43 {strides = array<i32>} : memref<8x8x8xf32, #tpu.memory_space<vmem>>, vector<1x8x8xf32>,
    %cst_13 = arith.constant 1.000000e+00 : f32
    %44 = vector.broadcast %cst_13 : f32 to vector<8x8xf32>
    %45 = arith.subf %44, %33 : vector<8x8xf32>
    %cst_14 = arith.constant 1.000000e+00 : f32
    %46 = vector.broadcast %cst_14 : f32 to vector<8x8xf32>
    %47 = arith.subf %29, %46 : vector<8x8xf32>
    %48 = math.absf %47 : vector<8x8xf32>
    %cst_15 = arith.constant 1.000000e+00 : f32
    %49 = vector.broadcast %cst_15 : f32 to vector<8x8xf32>
    %50 = arith.cmpf olt, %48, %49 : vector<8x8xf32>
    %cst_16 = arith.constant 0.000000e+00 : f32
    %51 = vector.broadcast %cst_16 : f32 to vector<8x8xf32>
    %52 = arith.select %50, %45, %51 : vector<8x8xi1>, vector<8x8xf32>
    %c1 = arith.constant 1 : index
    %c0_17 = arith.constant 0 : index
    %c0_18 = arith.constant 0 : index
    %53 = vector.load %arg8[%c1, %c0_17, %c0_18] : memref<8x8x8xf32, #tpu.memory_space<vmem>>, vector<1x8x8xf32>
    %54 = vector.shape_cast %53 : vector<1x8x8xf32> to vector<8x8xf32>
    %55 = vector.shape_cast %52 : vector<8x8xf32> to vector<1x8x8xf32>
    tpu.vector_store %arg8[%c1, %c0_17, %c0_18], %55 {strides = array<i32>} : memref<8x8x8xf32, #tpu.memory_space<vmem>>, vector<1x8x8xf32>,
    %cst_19 = arith.constant 2.000000e+00 : f32
    %56 = vector.broadcast %cst_19 : f32 to vector<8x8xf32>
    %57 = arith.subf %29, %56 : vector<8x8xf32>
    %58 = math.absf %57 : vector<8x8xf32>
    %cst_20 = arith.constant 1.000000e+00 : f32
    %59 = vector.broadcast %cst_20 : f32 to vector<8x8xf32>
    %60 = arith.cmpf olt, %58, %59 : vector<8x8xf32>
    %cst_21 = arith.constant 0.000000e+00 : f32
    %61 = vector.broadcast %cst_21 : f32 to vector<8x8xf32>
    %62 = arith.select %60, %33, %61 : vector<8x8xi1>, vector<8x8xf32>
    %c2 = arith.constant 2 : index
    %c0_22 = arith.constant 0 : index
    %c0_23 = arith.constant 0 : index
    %63 = vector.load %arg8[%c2, %c0_22, %c0_23] : memref<8x8x8xf32, #tpu.memory_space<vmem>>, vector<1x8x8xf32>
    %64 = vector.shape_cast %63 : vector<1x8x8xf32> to vector<8x8xf32>
    %65 = vector.shape_cast %62 : vector<8x8xf32> to vector<1x8x8xf32>
    tpu.vector_store %arg8[%c2, %c0_22, %c0_23], %65 {strides = array<i32>} : memref<8x8x8xf32, #tpu.memory_space<vmem>>, vector<1x8x8xf32>,
    %cst_24 = arith.constant 1.000000e+00 : f32
    %66 = vector.broadcast %cst_24 : f32 to vector<8x8xf32>
    %67 = arith.subf %66, %33 : vector<8x8xf32>
    %cst_25 = arith.constant 3.000000e+00 : f32
    %68 = vector.broadcast %cst_25 : f32 to vector<8x8xf32>
    %69 = arith.subf %29, %68 : vector<8x8xf32>
    %70 = math.absf %69 : vector<8x8xf32>
    %cst_26 = arith.constant 1.000000e+00 : f32
    %71 = vector.broadcast %cst_26 : f32 to vector<8x8xf32>
    %72 = arith.cmpf olt, %70, %71 : vector<8x8xf32>
    %cst_27 = arith.constant 0.000000e+00 : f32
    %73 = vector.broadcast %cst_27 : f32 to vector<8x8xf32>
    %74 = arith.select %72, %67, %73 : vector<8x8xi1>, vector<8x8xf32>
    %c3 = arith.constant 3 : index
    %c0_28 = arith.constant 0 : index
    %c0_29 = arith.constant 0 : index
    %75 = vector.load %arg8[%c3, %c0_28, %c0_29] : memref<8x8x8xf32, #tpu.memory_space<vmem>>, vector<1x8x8xf32>
    %76 = vector.shape_cast %75 : vector<1x8x8xf32> to vector<8x8xf32>
    %77 = vector.shape_cast %74 : vector<8x8xf32> to vector<1x8x8xf32>
    tpu.vector_store %arg8[%c3, %c0_28, %c0_29], %77 {strides = array<i32>} : memref<8x8x8xf32, #tpu.memory_space<vmem>>, vector<1x8x8xf32>,
    %cst_30 = arith.constant 4.000000e+00 : f32
    %78 = vector.broadcast %cst_30 : f32 to vector<8x8xf32>
    %79 = arith.subf %29, %78 : vector<8x8xf32>
    %80 = math.absf %79 : vector<8x8xf32>
    %cst_31 = arith.constant 1.000000e+00 : f32
    %81 = vector.broadcast %cst_31 : f32 to vector<8x8xf32>
    %82 = arith.cmpf olt, %80, %81 : vector<8x8xf32>
    %cst_32 = arith.constant 0.000000e+00 : f32
    %83 = vector.broadcast %cst_32 : f32 to vector<8x8xf32>
    %84 = arith.select %82, %33, %83 : vector<8x8xi1>, vector<8x8xf32>
    %c4 = arith.constant 4 : index
    %c0_33 = arith.constant 0 : index
    %c0_34 = arith.constant 0 : index
    %85 = vector.load %arg8[%c4, %c0_33, %c0_34] : memref<8x8x8xf32, #tpu.memory_space<vmem>>, vector<1x8x8xf32>
    %86 = vector.shape_cast %85 : vector<1x8x8xf32> to vector<8x8xf32>
    %87 = vector.shape_cast %84 : vector<8x8xf32> to vector<1x8x8xf32>
    tpu.vector_store %arg8[%c4, %c0_33, %c0_34], %87 {strides = array<i32>} : memref<8x8x8xf32, #tpu.memory_space<vmem>>, vector<1x8x8xf32>,
    %cst_35 = arith.constant 1.000000e+00 : f32
    %88 = vector.broadcast %cst_35 : f32 to vector<8x8xf32>
    %89 = arith.subf %88, %33 : vector<8x8xf32>
    %cst_36 = arith.constant 5.000000e+00 : f32
    %90 = vector.broadcast %cst_36 : f32 to vector<8x8xf32>
    %91 = arith.subf %29, %90 : vector<8x8xf32>
    %92 = math.absf %91 : vector<8x8xf32>
    %cst_37 = arith.constant 1.000000e+00 : f32
    %93 = vector.broadcast %cst_37 : f32 to vector<8x8xf32>
    %94 = arith.cmpf olt, %92, %93 : vector<8x8xf32>
    %cst_38 = arith.constant 0.000000e+00 : f32
    %95 = vector.broadcast %cst_38 : f32 to vector<8x8xf32>
    %96 = arith.select %94, %89, %95 : vector<8x8xi1>, vector<8x8xf32>
    %c5 = arith.constant 5 : index
    %c0_39 = arith.constant 0 : index
    %c0_40 = arith.constant 0 : index
    %97 = vector.load %arg8[%c5, %c0_39, %c0_40] : memref<8x8x8xf32, #tpu.memory_space<vmem>>, vector<1x8x8xf32>
    %98 = vector.shape_cast %97 : vector<1x8x8xf32> to vector<8x8xf32>
    %99 = vector.shape_cast %96 : vector<8x8xf32> to vector<1x8x8xf32>
    tpu.vector_store %arg8[%c5, %c0_39, %c0_40], %99 {strides = array<i32>} : memref<8x8x8xf32, #tpu.memory_space<vmem>>, vector<1x8x8xf32>,
    %cst_41 = arith.constant 6.000000e+00 : f32
    %100 = vector.broadcast %cst_41 : f32 to vector<8x8xf32>
    %101 = arith.subf %29, %100 : vector<8x8xf32>
    %102 = math.absf %101 : vector<8x8xf32>
    %cst_42 = arith.constant 1.000000e+00 : f32
    %103 = vector.broadcast %cst_42 : f32 to vector<8x8xf32>
    %104 = arith.cmpf olt, %102, %103 : vector<8x8xf32>
    %cst_43 = arith.constant 0.000000e+00 : f32
    %105 = vector.broadcast %cst_43 : f32 to vector<8x8xf32>
    %106 = arith.select %104, %33, %105 : vector<8x8xi1>, vector<8x8xf32>
    %c6 = arith.constant 6 : index
    %c0_44 = arith.constant 0 : index
    %c0_45 = arith.constant 0 : index
    %107 = vector.load %arg8[%c6, %c0_44, %c0_45] : memref<8x8x8xf32, #tpu.memory_space<vmem>>, vector<1x8x8xf32>
    %108 = vector.shape_cast %107 : vector<1x8x8xf32> to vector<8x8xf32>
    %109 = vector.shape_cast %106 : vector<8x8xf32> to vector<1x8x8xf32>
    tpu.vector_store %arg8[%c6, %c0_44, %c0_45], %109 {strides = array<i32>} : memref<8x8x8xf32, #tpu.memory_space<vmem>>, vector<1x8x8xf32>,
    %cst_46 = arith.constant 1.000000e+00 : f32
    %110 = vector.broadcast %cst_46 : f32 to vector<8x8xf32>
    %111 = arith.subf %110, %33 : vector<8x8xf32>
    %cst_47 = arith.constant 7.000000e+00 : f32
    %112 = vector.broadcast %cst_47 : f32 to vector<8x8xf32>
    %113 = arith.subf %29, %112 : vector<8x8xf32>
    %114 = math.absf %113 : vector<8x8xf32>
    %cst_48 = arith.constant 1.000000e+00 : f32
    %115 = vector.broadcast %cst_48 : f32 to vector<8x8xf32>
    %116 = arith.cmpf olt, %114, %115 : vector<8x8xf32>
    %cst_49 = arith.constant 0.000000e+00 : f32
    %117 = vector.broadcast %cst_49 : f32 to vector<8x8xf32>
    %118 = arith.select %116, %111, %117 : vector<8x8xi1>, vector<8x8xf32>
    %c7 = arith.constant 7 : index
    %c0_50 = arith.constant 0 : index
    %c0_51 = arith.constant 0 : index
    %119 = vector.load %arg8[%c7, %c0_50, %c0_51] : memref<8x8x8xf32, #tpu.memory_space<vmem>>, vector<1x8x8xf32>
    %120 = vector.shape_cast %119 : vector<1x8x8xf32> to vector<8x8xf32>
    %121 = vector.shape_cast %118 : vector<8x8xf32> to vector<1x8x8xf32>
    tpu.vector_store %arg8[%c7, %c0_50, %c0_51], %121 {strides = array<i32>} : memref<8x8x8xf32, #tpu.memory_space<vmem>>, vector<1x8x8xf32>,
    %c0_i32_52 = arith.constant 0 : i32
    %c32_i32 = arith.constant 32 : i32
    %122 = arith.addi %c0_i32_52, %c32_i32 : i32
    %c1_i32 = arith.constant 1 : i32
    scf.for %arg10 = %c0_i32_52 to %122 step %c1_i32  : i32 {
      %c1_i32_56 = arith.constant 1 : i32
      %126 = arith.muli %arg10, %c1_i32_56 : i32
      %c0_i32_57 = arith.constant 0 : i32
      %127 = arith.addi %c0_i32_57, %126 : i32
      %cst_58 = arith.constant 0.000000e+00 : f32
      %128 = vector.broadcast %cst_58 : f32 to vector<8x8xf32>
      %c0_i32_59 = arith.constant 0 : i32
      %c8_i32 = arith.constant 8 : i32
      %129 = arith.addi %c0_i32_59, %c8_i32 : i32
      %c1_i32_60 = arith.constant 1 : i32
      %130 = scf.for %arg11 = %c0_i32_59 to %129 step %c1_i32_60 iter_args(%arg12 = %128) -> (vector<8x8xf32>)  : i32 {
        %140 = arith.index_cast %arg11 : i32 to index
        %c0_71 = arith.constant 0 : index
        %c0_72 = arith.constant 0 : index
        %141 = vector.load %arg8[%140, %c0_71, %c0_72] : memref<8x8x8xf32, #tpu.memory_space<vmem>>, vector<1x8x8xf32>
        %142 = vector.shape_cast %141 : vector<1x8x8xf32> to vector<8x8xf32>
        %143 = arith.index_cast %arg11 : i32 to index
        %144 = arith.index_cast %127 : i32 to index
        %145 = memref.load %arg6[%143, %144] : memref<8x32xf32, #tpu.memory_space<smem>>
        %146 = vector.broadcast %145 : f32 to vector<8x8xf32>
        %147 = arith.mulf %142, %146 : vector<8x8xf32>
        %148 = arith.addf %arg12, %147 : vector<8x8xf32>
        scf.yield %148 : vector<8x8xf32>
      }
      %c8_i32_61 = arith.constant 8 : i32
      %cst_62 = arith.constant 0.000000e+00 : f32
      %131 = vector.broadcast %cst_62 : f32 to vector<8x8xf32>
      %132 = arith.maximumf %130, %131 : vector<8x8xf32>
      %c0_63 = arith.constant 0 : index
      %133 = arith.index_cast %127 : i32 to index
      %c0_64 = arith.constant 0 : index
      %c0_65 = arith.constant 0 : index
      %134 = vector.load %arg5[%c0_63, %133, %c0_64, %c0_65] : memref<1x32x16x8xf32, #tpu.memory_space<vmem>>, vector<1x1x16x8xf32>
      %135 = vector.shape_cast %134 : vector<1x1x16x8xf32> to vector<16x8xf32>
      %c0_66 = arith.constant 0 : index
      %c0_67 = arith.constant 0 : index
      %136 = vector.load %arg9[%c0_66, %c0_67] : memref<16x8xf32, #tpu.memory_space<vmem>>, vector<16x8xf32>
      %cst_68 = arith.constant dense<0.000000e+00> : vector<16x8xf32>
      %137 = tpu.matmul %135, %132, %cst_68 {dimension_numbers = #tpu.dot_dimension_numbers<[1], [0], [0], [1], [0, 0, 1, 1], [], []>} : vector<16x8xf32>, vector<8x8xf32>, vector<16x8xf32> -> vector<16x8xf32>
      %138 = arith.addf %136, %137 : vector<16x8xf32>
      %c0_69 = arith.constant 0 : index
      %c0_70 = arith.constant 0 : index
      %139 = vector.load %arg9[%c0_69, %c0_70] : memref<16x8xf32, #tpu.memory_space<vmem>>, vector<16x8xf32>
      tpu.vector_store %arg9[%c0_69, %c0_70], %138 {strides = array<i32>} : memref<16x8xf32, #tpu.memory_space<vmem>>, vector<16x8xf32>,
    }
    %c32_i32_53 = arith.constant 32 : i32
    %c0_i32_54 = arith.constant 0 : i32
    %123 = arith.cmpi eq, %arg2, %c0_i32_54 : i32
    %124 = arith.extui %123 : i1 to i32
    %c0_i32_55 = arith.constant 0 : i32
    %125 = arith.cmpi ne, %124, %c0_i32_55 : i32
    scf.if %125 {
      %c0_56 = arith.constant 0 : index
      %c0_57 = arith.constant 0 : index
      %126 = vector.load %arg9[%c0_56, %c0_57] : memref<16x8xf32, #tpu.memory_space<vmem>>, vector<16x8xf32>
      %cst_58 = arith.constant 0.000000e+00 : f32
      %127 = vector.broadcast %cst_58 : f32 to vector<16x8xf32>
      %128 = arith.maximumf %126, %127 : vector<16x8xf32>
      %c0_59 = arith.constant 0 : index
      %c0_60 = arith.constant 0 : index
      %c0_61 = arith.constant 0 : index
      %129 = vector.load %arg7[%c0_59, %c0_60, %c0_61] : memref<1x16x8xf32, #tpu.memory_space<vmem>>, vector<1x16x8xf32>
      %130 = vector.shape_cast %129 : vector<1x16x8xf32> to vector<16x8xf32>
      %131 = vector.shape_cast %128 : vector<16x8xf32> to vector<1x16x8xf32>
      tpu.vector_store %arg7[%c0_59, %c0_60, %c0_61], %131 {strides = array<i32>} : memref<1x16x8xf32, #tpu.memory_space<vmem>>, vector<1x16x8xf32>,
    } else {
    }
    return
  }
  func.func @transform_0(%arg0: i32, %arg1: i32, %arg2: i32) -> (i32, i32, i32) {
    %c0_i32 = arith.constant 0 : i32
    %c0_i32_0 = arith.constant 0 : i32
    return %arg0, %c0_i32, %arg1 : i32, i32, i32
  }
  func.func @transform_1(%arg0: i32, %arg1: i32, %arg2: i32) -> (i32, i32, i32) {
    %c0_i32 = arith.constant 0 : i32
    %c0_i32_0 = arith.constant 0 : i32
    return %arg0, %arg2, %c0_i32 : i32, i32, i32
  }
  func.func @transform_2(%arg0: i32, %arg1: i32, %arg2: i32) -> (i32, i32, i32, i32) {
    %c0_i32 = arith.constant 0 : i32
    %c0_i32_0 = arith.constant 0 : i32
    %c0_i32_1 = arith.constant 0 : i32
    %c0_i32_2 = arith.constant 0 : i32
    return %arg0, %c0_i32, %c0_i32_0, %c0_i32_1 : i32, i32, i32, i32
  }
  func.func @transform_3(%arg0: i32, %arg1: i32, %arg2: i32) -> (i32, i32) {
    %c0_i32 = arith.constant 0 : i32
    %c0_i32_0 = arith.constant 0 : i32
    %c0_i32_1 = arith.constant 0 : i32
    return %c0_i32, %c0_i32_0 : i32, i32
  }
  func.func @transform_4(%arg0: i32, %arg1: i32, %arg2: i32) -> (i32, i32, i32) {
    %c0_i32 = arith.constant 0 : i32
    %c0_i32_0 = arith.constant 0 : i32
    return %arg0, %c0_i32, %arg1 : i32, i32, i32
  }
}

module attributes {stable_mosaic.version = 11 : i64} {
  func.func @_fused_conv_kernel(%arg0: i32, %arg1: i32, %arg2: i32, %arg3: memref<1x3x8xf32, #tpu.memory_space<vmem>>, %arg4: memref<1x8x3xf32, #tpu.memory_space<vmem>>, %arg5: memref<1x32x8x8xf32, #tpu.memory_space<vmem>>, %arg6: memref<8x32xf32, #tpu.memory_space<smem>>, %arg7: memref<1x8x8xf32, #tpu.memory_space<vmem>>, %arg8: memref<8x8x8xf32, #tpu.memory_space<vmem>>, %arg9: memref<8x8xf32, #tpu.memory_space<vmem>>) attributes {dimension_semantics = [#tpu.dimension_semantics<parallel>, #tpu.dimension_semantics<parallel>, #tpu.dimension_semantics<arbitrary>], iteration_bounds = array<i64: 2, 1, 1>, scalar_prefetch = 0 : i64, scratch_operands = 2 : i64, tpu.core_type = #tpu.core_type<tc>, window_params = [{transform_indices = @transform_0, window_bounds = array<i64: 1, 3, 8>}, {transform_indices = @transform_1, window_bounds = array<i64: 1, 8, 3>}, {transform_indices = @transform_2, window_bounds = array<i64: 1, 32, 8, 8>}, {transform_indices = @transform_3, window_bounds = array<i64: 8, 32>}, {transform_indices = @transform_4, window_bounds = array<i64: 1, 8, 8>}]} {
    %c0_i32 = arith.constant 0 : i32
    %0 = arith.cmpi eq, %arg2, %c0_i32 : i32
    %1 = arith.extui %0 : i1 to i32
    %c0_i32_0 = arith.constant 0 : i32
    %2 = arith.cmpi ne, %1, %c0_i32_0 : i32
    scf.if %2 {
      %cst_56 = arith.constant 0.000000e+00 : f32
      %126 = vector.broadcast %cst_56 : f32 to vector<8x8xf32>
      %c0_57 = arith.constant 0 : index
      %c0_58 = arith.constant 0 : index
      %127 = vector.load %arg9[%c0_57, %c0_58] : memref<8x8xf32, #tpu.memory_space<vmem>>, vector<8x8xf32>
      tpu.vector_store %arg9[%c0_57, %c0_58], %126 {strides = array<i32>} : memref<8x8xf32, #tpu.memory_space<vmem>>, vector<8x8xf32>,
    } else {
    }
    %c0 = arith.constant 0 : index
    %c0_1 = arith.constant 0 : index
    %c0_2 = arith.constant 0 : index
    %3 = vector.load %arg3[%c0, %c0_1, %c0_2] : memref<1x3x8xf32, #tpu.memory_space<vmem>>, vector<1x3x8xf32>
    %4 = vector.shape_cast %3 : vector<1x3x8xf32> to vector<3x8xf32>
    %c0_3 = arith.constant 0 : index
    %c0_4 = arith.constant 0 : index
    %c0_5 = arith.constant 0 : index
    %5 = vector.load %arg4[%c0_3, %c0_4, %c0_5] : memref<1x8x3xf32, #tpu.memory_space<vmem>>, vector<1x8x3xf32>
    %6 = vector.shape_cast %5 : vector<1x8x3xf32> to vector<8x3xf32>
    %7 = vector.extract_strided_slice %6 {offsets = [0, 0], sizes = [8, 1], strides = [1, 1]} : vector<8x3xf32> to vector<8x1xf32>
    %8 = vector.extract_strided_slice %4 {offsets = [0, 0], sizes = [1, 8], strides = [1, 1]} : vector<3x8xf32> to vector<1x8xf32>
    %9 = vector.broadcast %7 : vector<8x1xf32> to vector<8x8xf32>
    %10 = vector.broadcast %8 : vector<1x8xf32> to vector<8x8xf32>
    %11 = arith.subf %9, %10 : vector<8x8xf32>
    %12 = arith.mulf %11, %11 : vector<8x8xf32>
    %13 = vector.extract_strided_slice %6 {offsets = [0, 1], sizes = [8, 1], strides = [1, 1]} : vector<8x3xf32> to vector<8x1xf32>
    %14 = vector.extract_strided_slice %4 {offsets = [1, 0], sizes = [1, 8], strides = [1, 1]} : vector<3x8xf32> to vector<1x8xf32>
    %15 = vector.broadcast %13 : vector<8x1xf32> to vector<8x8xf32>
    %16 = vector.broadcast %14 : vector<1x8xf32> to vector<8x8xf32>
    %17 = arith.subf %15, %16 : vector<8x8xf32>
    %18 = arith.mulf %17, %17 : vector<8x8xf32>
    %19 = arith.addf %12, %18 : vector<8x8xf32>
    %20 = vector.extract_strided_slice %6 {offsets = [0, 2], sizes = [8, 1], strides = [1, 1]} : vector<8x3xf32> to vector<8x1xf32>
    %21 = vector.extract_strided_slice %4 {offsets = [2, 0], sizes = [1, 8], strides = [1, 1]} : vector<3x8xf32> to vector<1x8xf32>
    %22 = vector.broadcast %20 : vector<8x1xf32> to vector<8x8xf32>
    %23 = vector.broadcast %21 : vector<1x8xf32> to vector<8x8xf32>
    %24 = arith.subf %22, %23 : vector<8x8xf32>
    %25 = arith.mulf %24, %24 : vector<8x8xf32>
    %26 = arith.addf %19, %25 : vector<8x8xf32>
    %27 = math.sqrt %26 : vector<8x8xf32>
    %cst = arith.constant 2.33333325 : f32
    %28 = vector.broadcast %cst : f32 to vector<8x8xf32>
    %29 = arith.mulf %27, %28 : vector<8x8xf32>
    %cst_6 = arith.constant 1.57079637 : f32
    %30 = vector.broadcast %cst_6 : f32 to vector<8x8xf32>
    %31 = arith.mulf %30, %29 : vector<8x8xf32>
    %32 = math.cos %31 : vector<8x8xf32>
    %33 = arith.mulf %32, %32 : vector<8x8xf32>
    %cst_7 = arith.constant 0.000000e+00 : f32
    %34 = vector.broadcast %cst_7 : f32 to vector<8x8xf32>
    %35 = arith.subf %29, %34 : vector<8x8xf32>
    %36 = math.absf %35 : vector<8x8xf32>
    %cst_8 = arith.constant 1.000000e+00 : f32
    %37 = vector.broadcast %cst_8 : f32 to vector<8x8xf32>
    %38 = arith.cmpf olt, %36, %37 : vector<8x8xf32>
    %cst_9 = arith.constant 0.000000e+00 : f32
    %39 = vector.broadcast %cst_9 : f32 to vector<8x8xf32>
    %40 = arith.select %38, %33, %39 : vector<8x8xi1>, vector<8x8xf32>
    %c0_10 = arith.constant 0 : index
    %c0_11 = arith.constant 0 : index
    %c0_12 = arith.constant 0 : index
    %41 = vector.load %arg8[%c0_10, %c0_11, %c0_12] : memref<8x8x8xf32, #tpu.memory_space<vmem>>, vector<1x8x8xf32>
    %42 = vector.shape_cast %41 : vector<1x8x8xf32> to vector<8x8xf32>
    %43 = vector.shape_cast %40 : vector<8x8xf32> to vector<1x8x8xf32>
    tpu.vector_store %arg8[%c0_10, %c0_11, %c0_12], %43 {strides = array<i32>} : memref<8x8x8xf32, #tpu.memory_space<vmem>>, vector<1x8x8xf32>,
    %cst_13 = arith.constant 1.000000e+00 : f32
    %44 = vector.broadcast %cst_13 : f32 to vector<8x8xf32>
    %45 = arith.subf %44, %33 : vector<8x8xf32>
    %cst_14 = arith.constant 1.000000e+00 : f32
    %46 = vector.broadcast %cst_14 : f32 to vector<8x8xf32>
    %47 = arith.subf %29, %46 : vector<8x8xf32>
    %48 = math.absf %47 : vector<8x8xf32>
    %cst_15 = arith.constant 1.000000e+00 : f32
    %49 = vector.broadcast %cst_15 : f32 to vector<8x8xf32>
    %50 = arith.cmpf olt, %48, %49 : vector<8x8xf32>
    %cst_16 = arith.constant 0.000000e+00 : f32
    %51 = vector.broadcast %cst_16 : f32 to vector<8x8xf32>
    %52 = arith.select %50, %45, %51 : vector<8x8xi1>, vector<8x8xf32>
    %c1 = arith.constant 1 : index
    %c0_17 = arith.constant 0 : index
    %c0_18 = arith.constant 0 : index
    %53 = vector.load %arg8[%c1, %c0_17, %c0_18] : memref<8x8x8xf32, #tpu.memory_space<vmem>>, vector<1x8x8xf32>
    %54 = vector.shape_cast %53 : vector<1x8x8xf32> to vector<8x8xf32>
    %55 = vector.shape_cast %52 : vector<8x8xf32> to vector<1x8x8xf32>
    tpu.vector_store %arg8[%c1, %c0_17, %c0_18], %55 {strides = array<i32>} : memref<8x8x8xf32, #tpu.memory_space<vmem>>, vector<1x8x8xf32>,
    %cst_19 = arith.constant 2.000000e+00 : f32
    %56 = vector.broadcast %cst_19 : f32 to vector<8x8xf32>
    %57 = arith.subf %29, %56 : vector<8x8xf32>
    %58 = math.absf %57 : vector<8x8xf32>
    %cst_20 = arith.constant 1.000000e+00 : f32
    %59 = vector.broadcast %cst_20 : f32 to vector<8x8xf32>
    %60 = arith.cmpf olt, %58, %59 : vector<8x8xf32>
    %cst_21 = arith.constant 0.000000e+00 : f32
    %61 = vector.broadcast %cst_21 : f32 to vector<8x8xf32>
    %62 = arith.select %60, %33, %61 : vector<8x8xi1>, vector<8x8xf32>
    %c2 = arith.constant 2 : index
    %c0_22 = arith.constant 0 : index
    %c0_23 = arith.constant 0 : index
    %63 = vector.load %arg8[%c2, %c0_22, %c0_23] : memref<8x8x8xf32, #tpu.memory_space<vmem>>, vector<1x8x8xf32>
    %64 = vector.shape_cast %63 : vector<1x8x8xf32> to vector<8x8xf32>
    %65 = vector.shape_cast %62 : vector<8x8xf32> to vector<1x8x8xf32>
    tpu.vector_store %arg8[%c2, %c0_22, %c0_23], %65 {strides = array<i32>} : memref<8x8x8xf32, #tpu.memory_space<vmem>>, vector<1x8x8xf32>,
    %cst_24 = arith.constant 1.000000e+00 : f32
    %66 = vector.broadcast %cst_24 : f32 to vector<8x8xf32>
    %67 = arith.subf %66, %33 : vector<8x8xf32>
    %cst_25 = arith.constant 3.000000e+00 : f32
    %68 = vector.broadcast %cst_25 : f32 to vector<8x8xf32>
    %69 = arith.subf %29, %68 : vector<8x8xf32>
    %70 = math.absf %69 : vector<8x8xf32>
    %cst_26 = arith.constant 1.000000e+00 : f32
    %71 = vector.broadcast %cst_26 : f32 to vector<8x8xf32>
    %72 = arith.cmpf olt, %70, %71 : vector<8x8xf32>
    %cst_27 = arith.constant 0.000000e+00 : f32
    %73 = vector.broadcast %cst_27 : f32 to vector<8x8xf32>
    %74 = arith.select %72, %67, %73 : vector<8x8xi1>, vector<8x8xf32>
    %c3 = arith.constant 3 : index
    %c0_28 = arith.constant 0 : index
    %c0_29 = arith.constant 0 : index
    %75 = vector.load %arg8[%c3, %c0_28, %c0_29] : memref<8x8x8xf32, #tpu.memory_space<vmem>>, vector<1x8x8xf32>
    %76 = vector.shape_cast %75 : vector<1x8x8xf32> to vector<8x8xf32>
    %77 = vector.shape_cast %74 : vector<8x8xf32> to vector<1x8x8xf32>
    tpu.vector_store %arg8[%c3, %c0_28, %c0_29], %77 {strides = array<i32>} : memref<8x8x8xf32, #tpu.memory_space<vmem>>, vector<1x8x8xf32>,
    %cst_30 = arith.constant 4.000000e+00 : f32
    %78 = vector.broadcast %cst_30 : f32 to vector<8x8xf32>
    %79 = arith.subf %29, %78 : vector<8x8xf32>
    %80 = math.absf %79 : vector<8x8xf32>
    %cst_31 = arith.constant 1.000000e+00 : f32
    %81 = vector.broadcast %cst_31 : f32 to vector<8x8xf32>
    %82 = arith.cmpf olt, %80, %81 : vector<8x8xf32>
    %cst_32 = arith.constant 0.000000e+00 : f32
    %83 = vector.broadcast %cst_32 : f32 to vector<8x8xf32>
    %84 = arith.select %82, %33, %83 : vector<8x8xi1>, vector<8x8xf32>
    %c4 = arith.constant 4 : index
    %c0_33 = arith.constant 0 : index
    %c0_34 = arith.constant 0 : index
    %85 = vector.load %arg8[%c4, %c0_33, %c0_34] : memref<8x8x8xf32, #tpu.memory_space<vmem>>, vector<1x8x8xf32>
    %86 = vector.shape_cast %85 : vector<1x8x8xf32> to vector<8x8xf32>
    %87 = vector.shape_cast %84 : vector<8x8xf32> to vector<1x8x8xf32>
    tpu.vector_store %arg8[%c4, %c0_33, %c0_34], %87 {strides = array<i32>} : memref<8x8x8xf32, #tpu.memory_space<vmem>>, vector<1x8x8xf32>,
    %cst_35 = arith.constant 1.000000e+00 : f32
    %88 = vector.broadcast %cst_35 : f32 to vector<8x8xf32>
    %89 = arith.subf %88, %33 : vector<8x8xf32>
    %cst_36 = arith.constant 5.000000e+00 : f32
    %90 = vector.broadcast %cst_36 : f32 to vector<8x8xf32>
    %91 = arith.subf %29, %90 : vector<8x8xf32>
    %92 = math.absf %91 : vector<8x8xf32>
    %cst_37 = arith.constant 1.000000e+00 : f32
    %93 = vector.broadcast %cst_37 : f32 to vector<8x8xf32>
    %94 = arith.cmpf olt, %92, %93 : vector<8x8xf32>
    %cst_38 = arith.constant 0.000000e+00 : f32
    %95 = vector.broadcast %cst_38 : f32 to vector<8x8xf32>
    %96 = arith.select %94, %89, %95 : vector<8x8xi1>, vector<8x8xf32>
    %c5 = arith.constant 5 : index
    %c0_39 = arith.constant 0 : index
    %c0_40 = arith.constant 0 : index
    %97 = vector.load %arg8[%c5, %c0_39, %c0_40] : memref<8x8x8xf32, #tpu.memory_space<vmem>>, vector<1x8x8xf32>
    %98 = vector.shape_cast %97 : vector<1x8x8xf32> to vector<8x8xf32>
    %99 = vector.shape_cast %96 : vector<8x8xf32> to vector<1x8x8xf32>
    tpu.vector_store %arg8[%c5, %c0_39, %c0_40], %99 {strides = array<i32>} : memref<8x8x8xf32, #tpu.memory_space<vmem>>, vector<1x8x8xf32>,
    %cst_41 = arith.constant 6.000000e+00 : f32
    %100 = vector.broadcast %cst_41 : f32 to vector<8x8xf32>
    %101 = arith.subf %29, %100 : vector<8x8xf32>
    %102 = math.absf %101 : vector<8x8xf32>
    %cst_42 = arith.constant 1.000000e+00 : f32
    %103 = vector.broadcast %cst_42 : f32 to vector<8x8xf32>
    %104 = arith.cmpf olt, %102, %103 : vector<8x8xf32>
    %cst_43 = arith.constant 0.000000e+00 : f32
    %105 = vector.broadcast %cst_43 : f32 to vector<8x8xf32>
    %106 = arith.select %104, %33, %105 : vector<8x8xi1>, vector<8x8xf32>
    %c6 = arith.constant 6 : index
    %c0_44 = arith.constant 0 : index
    %c0_45 = arith.constant 0 : index
    %107 = vector.load %arg8[%c6, %c0_44, %c0_45] : memref<8x8x8xf32, #tpu.memory_space<vmem>>, vector<1x8x8xf32>
    %108 = vector.shape_cast %107 : vector<1x8x8xf32> to vector<8x8xf32>
    %109 = vector.shape_cast %106 : vector<8x8xf32> to vector<1x8x8xf32>
    tpu.vector_store %arg8[%c6, %c0_44, %c0_45], %109 {strides = array<i32>} : memref<8x8x8xf32, #tpu.memory_space<vmem>>, vector<1x8x8xf32>,
    %cst_46 = arith.constant 1.000000e+00 : f32
    %110 = vector.broadcast %cst_46 : f32 to vector<8x8xf32>
    %111 = arith.subf %110, %33 : vector<8x8xf32>
    %cst_47 = arith.constant 7.000000e+00 : f32
    %112 = vector.broadcast %cst_47 : f32 to vector<8x8xf32>
    %113 = arith.subf %29, %112 : vector<8x8xf32>
    %114 = math.absf %113 : vector<8x8xf32>
    %cst_48 = arith.constant 1.000000e+00 : f32
    %115 = vector.broadcast %cst_48 : f32 to vector<8x8xf32>
    %116 = arith.cmpf olt, %114, %115 : vector<8x8xf32>
    %cst_49 = arith.constant 0.000000e+00 : f32
    %117 = vector.broadcast %cst_49 : f32 to vector<8x8xf32>
    %118 = arith.select %116, %111, %117 : vector<8x8xi1>, vector<8x8xf32>
    %c7 = arith.constant 7 : index
    %c0_50 = arith.constant 0 : index
    %c0_51 = arith.constant 0 : index
    %119 = vector.load %arg8[%c7, %c0_50, %c0_51] : memref<8x8x8xf32, #tpu.memory_space<vmem>>, vector<1x8x8xf32>
    %120 = vector.shape_cast %119 : vector<1x8x8xf32> to vector<8x8xf32>
    %121 = vector.shape_cast %118 : vector<8x8xf32> to vector<1x8x8xf32>
    tpu.vector_store %arg8[%c7, %c0_50, %c0_51], %121 {strides = array<i32>} : memref<8x8x8xf32, #tpu.memory_space<vmem>>, vector<1x8x8xf32>,
    %c0_i32_52 = arith.constant 0 : i32
    %c32_i32 = arith.constant 32 : i32
    %122 = arith.addi %c0_i32_52, %c32_i32 : i32
    %c1_i32 = arith.constant 1 : i32
    scf.for %arg10 = %c0_i32_52 to %122 step %c1_i32  : i32 {
      %c1_i32_56 = arith.constant 1 : i32
      %126 = arith.muli %arg10, %c1_i32_56 : i32
      %c0_i32_57 = arith.constant 0 : i32
      %127 = arith.addi %c0_i32_57, %126 : i32
      %cst_58 = arith.constant 0.000000e+00 : f32
      %128 = vector.broadcast %cst_58 : f32 to vector<8x8xf32>
      %c0_i32_59 = arith.constant 0 : i32
      %c8_i32 = arith.constant 8 : i32
      %129 = arith.addi %c0_i32_59, %c8_i32 : i32
      %c1_i32_60 = arith.constant 1 : i32
      %130 = scf.for %arg11 = %c0_i32_59 to %129 step %c1_i32_60 iter_args(%arg12 = %128) -> (vector<8x8xf32>)  : i32 {
        %140 = arith.index_cast %arg11 : i32 to index
        %c0_71 = arith.constant 0 : index
        %c0_72 = arith.constant 0 : index
        %141 = vector.load %arg8[%140, %c0_71, %c0_72] : memref<8x8x8xf32, #tpu.memory_space<vmem>>, vector<1x8x8xf32>
        %142 = vector.shape_cast %141 : vector<1x8x8xf32> to vector<8x8xf32>
        %143 = arith.index_cast %arg11 : i32 to index
        %144 = arith.index_cast %127 : i32 to index
        %145 = memref.load %arg6[%143, %144] : memref<8x32xf32, #tpu.memory_space<smem>>
        %146 = vector.broadcast %145 : f32 to vector<8x8xf32>
        %147 = arith.mulf %142, %146 : vector<8x8xf32>
        %148 = arith.addf %arg12, %147 : vector<8x8xf32>
        scf.yield %148 : vector<8x8xf32>
      }
      %c8_i32_61 = arith.constant 8 : i32
      %cst_62 = arith.constant 0.000000e+00 : f32
      %131 = vector.broadcast %cst_62 : f32 to vector<8x8xf32>
      %132 = arith.maximumf %130, %131 : vector<8x8xf32>
      %c0_63 = arith.constant 0 : index
      %133 = arith.index_cast %127 : i32 to index
      %c0_64 = arith.constant 0 : index
      %c0_65 = arith.constant 0 : index
      %134 = vector.load %arg5[%c0_63, %133, %c0_64, %c0_65] : memref<1x32x8x8xf32, #tpu.memory_space<vmem>>, vector<1x1x8x8xf32>
      %135 = vector.shape_cast %134 : vector<1x1x8x8xf32> to vector<8x8xf32>
      %c0_66 = arith.constant 0 : index
      %c0_67 = arith.constant 0 : index
      %136 = vector.load %arg9[%c0_66, %c0_67] : memref<8x8xf32, #tpu.memory_space<vmem>>, vector<8x8xf32>
      %cst_68 = arith.constant dense<0.000000e+00> : vector<8x8xf32>
      %137 = tpu.matmul %135, %132, %cst_68 {dimension_numbers = #tpu.dot_dimension_numbers<[1], [0], [0], [1], [0, 0, 1, 1], [], []>} : vector<8x8xf32>, vector<8x8xf32>, vector<8x8xf32> -> vector<8x8xf32>
      %138 = arith.addf %136, %137 : vector<8x8xf32>
      %c0_69 = arith.constant 0 : index
      %c0_70 = arith.constant 0 : index
      %139 = vector.load %arg9[%c0_69, %c0_70] : memref<8x8xf32, #tpu.memory_space<vmem>>, vector<8x8xf32>
      tpu.vector_store %arg9[%c0_69, %c0_70], %138 {strides = array<i32>} : memref<8x8xf32, #tpu.memory_space<vmem>>, vector<8x8xf32>,
    }
    %c32_i32_53 = arith.constant 32 : i32
    %c0_i32_54 = arith.constant 0 : i32
    %123 = arith.cmpi eq, %arg2, %c0_i32_54 : i32
    %124 = arith.extui %123 : i1 to i32
    %c0_i32_55 = arith.constant 0 : i32
    %125 = arith.cmpi ne, %124, %c0_i32_55 : i32
    scf.if %125 {
      %c0_56 = arith.constant 0 : index
      %c0_57 = arith.constant 0 : index
      %126 = vector.load %arg9[%c0_56, %c0_57] : memref<8x8xf32, #tpu.memory_space<vmem>>, vector<8x8xf32>
      %cst_58 = arith.constant 0.000000e+00 : f32
      %127 = vector.broadcast %cst_58 : f32 to vector<8x8xf32>
      %128 = arith.maximumf %126, %127 : vector<8x8xf32>
      %c0_59 = arith.constant 0 : index
      %c0_60 = arith.constant 0 : index
      %c0_61 = arith.constant 0 : index
      %129 = vector.load %arg7[%c0_59, %c0_60, %c0_61] : memref<1x8x8xf32, #tpu.memory_space<vmem>>, vector<1x8x8xf32>
      %130 = vector.shape_cast %129 : vector<1x8x8xf32> to vector<8x8xf32>
      %131 = vector.shape_cast %128 : vector<8x8xf32> to vector<1x8x8xf32>
      tpu.vector_store %arg7[%c0_59, %c0_60, %c0_61], %131 {strides = array<i32>} : memref<1x8x8xf32, #tpu.memory_space<vmem>>, vector<1x8x8xf32>,
    } else {
    }
    return
  }
  func.func @transform_0(%arg0: i32, %arg1: i32, %arg2: i32) -> (i32, i32, i32) {
    %c0_i32 = arith.constant 0 : i32
    %c0_i32_0 = arith.constant 0 : i32
    return %arg0, %c0_i32, %arg1 : i32, i32, i32
  }
  func.func @transform_1(%arg0: i32, %arg1: i32, %arg2: i32) -> (i32, i32, i32) {
    %c0_i32 = arith.constant 0 : i32
    %c0_i32_0 = arith.constant 0 : i32
    return %arg0, %arg2, %c0_i32 : i32, i32, i32
  }
  func.func @transform_2(%arg0: i32, %arg1: i32, %arg2: i32) -> (i32, i32, i32, i32) {
    %c0_i32 = arith.constant 0 : i32
    %c0_i32_0 = arith.constant 0 : i32
    %c0_i32_1 = arith.constant 0 : i32
    %c0_i32_2 = arith.constant 0 : i32
    return %arg0, %c0_i32, %c0_i32_0, %c0_i32_1 : i32, i32, i32, i32
  }
  func.func @transform_3(%arg0: i32, %arg1: i32, %arg2: i32) -> (i32, i32) {
    %c0_i32 = arith.constant 0 : i32
    %c0_i32_0 = arith.constant 0 : i32
    %c0_i32_1 = arith.constant 0 : i32
    return %c0_i32, %c0_i32_0 : i32, i32
  }
  func.func @transform_4(%arg0: i32, %arg1: i32, %arg2: i32) -> (i32, i32, i32) {
    %c0_i32 = arith.constant 0 : i32
    %c0_i32_0 = arith.constant 0 : i32
    return %arg0, %c0_i32, %arg1 : i32, i32, i32
  }
}

</mosaic_0001>

<llo_original>
// kernel: decoder_forward.2
$region0: #{decoder_forward.2}
  #allocation0 [shape = 'u32[]', space=smem, size = 0x4, offset = 0x4, fixed_abs, tag = 'smem constant byte address 0x4 - core index']
  #allocation1 [shape = 'u32[144,128]{1,0:T(1,128)}', space=vmem, size = 0x12000, scoped, tag = 'internal scratch']
  #allocation2 [shape = 'f32[8,8,8]{2,1,0:T(8,128)}', space=vmem, size = 0x8000, scoped, tag = 'scratch operand']
  #allocation3 [shape = 'f32[16,8]{1,0:T(8,128)}', space=vmem, size = 0x2000, scoped, tag = 'scratch operand']
  %s0 = inlined_call_operand.vmem [shape: f32[2,3,8], index: 0, kind: input, shape index: {}]
  %s1 = inlined_call_operand.vmem [shape: f32[2,8,3], index: 1, kind: input, shape index: {}]
  %s2 = inlined_call_operand.vmem [shape: f32[2,32,16,8], index: 2, kind: input, shape index: {}]
  %s3 = inlined_call_operand.vmem [shape: f32[8,32], index: 3, kind: input, shape index: {}]
  %s4 = inlined_call_operand.vmem [shape: f32[2,16,8], index: 4, kind: output, shape index: {}]
  %s5 = sld [smem:[#allocation0]]
  $region75: #{decoder_forward.2} parent=0
    _
  %s7 = ssub.s32 1, %s5
  %s8 = scalar_select 0, %s7, %s5
  $region1: #{decoder_forward.2} parent=0
    #allocation4 [shape = 'u8[4096]{0}', space=smem, size = 0x1000, scoped, tag = 'input window, operand 3, single buffered']
    #allocation5 [shape = 's32[2]{0}', space=sflag, size = 0x8, scoped, tag = 'scoped memory for decoder_forward.2']
    %9 = vsyncpa [#allocation5], 0
    loop: start=0, step=1, limit=4
    $region2: #{decoder_forward.2} parent=1 // loop_pre_header
      _
    $region3: #{decoder_forward.2} parent=1 // loop_header
      %s11 = sphi 0, %s15
      %p12 = scmp.ge.s32.totalorder %s11, 4
      %s18 = sphi 0, %s37
      %s19 = sphi 0, %s33
      %s20 = sphi 0, %s29
      %s21 = sphi 0, %s18
      %s22 = sphi 0, %s19
      %s23 = sphi 0, %s20
      %s24 = sphi 0, %s21
      %s25 = sphi 0, %s22
      %s26 = sphi 0, %s23
      %s42 = sphi 0, %s44
      %s45 = sphi 0, %s42
      %s46 = sphi 0, %s45
      %s62 = sphi 0, %s46
      %s70 = sphi 0, %s72
      %s73 = sphi 0, %s70
      %s74 = sphi 0, %s73
      %s90 = sphi 0, %s74
      %s96 = sphi 0, %s98
      %s99 = sphi 0, %s96
      %s100 = sphi 0, %s99
      %s116 = sphi 0, %s100
      %s120 = sphi 0, %s120
      %s122 = sphi 0, %s120
      %s123 = sphi 0, %s122
      %s137 = sphi 0, %s123
      %s145 = sphi 0, %s147
      %s148 = sphi 0, %s145
      %s149 = sphi 0, %s148
      %s165 = sphi 0, %s149
    $region4: #{decoder_forward.2} parent=1 // loop_header_branch
      %14 = sbr.rel (%p12) target = $region8
    $region5: #{decoder_forward.2} parent=1 // loop_body
      %s16 = ssub.s32 %s11, 1
      %s17 = ssub.s32 %s11, 2
      %s27 = sadd.s32 1, %s20
      %p28 = scmp.ge.s32.totalorder %s27, 1
      %s29 = scalar_select %p28, 0, %s27
      %s30 = sadd.s32 1, %s19
      %s31 = scalar_select %p28, %s30, %s19
      %p32 = scmp.ge.s32.totalorder %s31, 1
      %s33 = scalar_select %p32, 0, %s31
      %s34 = sadd.s32 1, %s18
      %s35 = scalar_select %p32, %s34, %s18
      %p36 = scmp.ge.s32.totalorder %s35, 2
      %s37 = scalar_select %p36, 0, %s35
      %s38 = ssub.s32 %s18, %s37
      %s39 = ssub.s32 %s19, %s33
      %s40 = sor.u32 %s38, %s39
      %p41 = scmp.eq.s32.totalorder %s40, 0
      %s43 = sadd.s32 %s42, 1
      %s44 = scalar_select %p41, %s42, %s43
      %p47 = pneg %p41
      %p48 = scmp.eq.s32.totalorder %s11, 1
      %p49 = por %p47, %p48
      %p50 = scmp.ne.s32.totalorder %s42, %s45
      %p51 = scmp.eq.s32.totalorder %s11, 0
      %p52 = por %p50, %p51
      %p53 = scmp.ne.s32.totalorder %s42, %s45
      %p54 = scmp.eq.s32.totalorder %s16, 1
      %p55 = por %p53, %p54
      %p56 = scmp.ne.s32.totalorder %s45, %s46
      %p57 = scmp.eq.s32.totalorder %s16, 0
      %p58 = por %p56, %p57
      %p59 = scmp.ne.s32.totalorder %s45, %s46
      %p60 = scmp.eq.s32.totalorder %s17, 1
      %p61 = por %p59, %p60
      %p63 = scmp.ne.s32.totalorder %s46, %s62
      %p64 = scmp.eq.s32.totalorder %s17, 0
      %p65 = por %p63, %p64
      %s66 = ssub.s32 %s18, %s37
      %s67 = ssub.s32 %s20, %s29
      %s68 = sor.u32 %s66, %s67
      %p69 = scmp.eq.s32.totalorder %s68, 0
      %s71 = sadd.s32 %s70, 1
      %s72 = scalar_select %p69, %s70, %s71
      %p75 = pneg %p69
      %p76 = scmp.eq.s32.totalorder %s11, 1
      %p77 = por %p75, %p76
      %p78 = scmp.ne.s32.totalorder %s70, %s73
      %p79 = scmp.eq.s32.totalorder %s11, 0
      %p80 = por %p78, %p79
      %p81 = scmp.ne.s32.totalorder %s70, %s73
      %p82 = scmp.eq.s32.totalorder %s16, 1
      %p83 = por %p81, %p82
      %p84 = scmp.ne.s32.totalorder %s73, %s74
      %p85 = scmp.eq.s32.totalorder %s16, 0
      %p86 = por %p84, %p85
      %p87 = scmp.ne.s32.totalorder %s73, %s74
      %p88 = scmp.eq.s32.totalorder %s17, 1
      %p89 = por %p87, %p88
      %p91 = scmp.ne.s32.totalorder %s74, %s90
      %p92 = scmp.eq.s32.totalorder %s17, 0
      %p93 = por %p91, %p92
      %s94 = ssub.s32 %s18, %s37
      %p95 = scmp.eq.s32.totalorder %s94, 0
      %s97 = sadd.s32 %s96, 1
      %s98 = scalar_select %p95, %s96, %s97
      %p101 = pneg %p95
      %p102 = scmp.eq.s32.totalorder %s11, 1
      %p103 = por %p101, %p102
      %p104 = scmp.ne.s32.totalorder %s96, %s99
      %p105 = scmp.eq.s32.totalorder %s11, 0
      %p106 = por %p104, %p105
      %p107 = scmp.ne.s32.totalorder %s96, %s99
      %p108 = scmp.eq.s32.totalorder %s16, 1
      %p109 = por %p107, %p108
      %p110 = scmp.ne.s32.totalorder %s99, %s100
      %p111 = scmp.eq.s32.totalorder %s16, 0
      %p112 = por %p110, %p111
      %p113 = scmp.ne.s32.totalorder %s99, %s100
      %p114 = scmp.eq.s32.totalorder %s17, 1
      %p115 = por %p113, %p114
      %p117 = scmp.ne.s32.totalorder %s100, %s116
      %p118 = scmp.eq.s32.totalorder %s17, 0
      %p119 = por %p117, %p118
      %s121 = sadd.s32 %s120, 1
      %p124 = scmp.eq.s32.totalorder %s11, 1
      %p125 = scmp.ne.s32.totalorder %s120, %s122
      %p126 = scmp.eq.s32.totalorder %s11, 0
      %p127 = por %p125, %p126
      %p128 = scmp.ne.s32.totalorder %s120, %s122
      %p129 = scmp.eq.s32.totalorder %s16, 1
      %p130 = por %p128, %p129
      %p131 = scmp.ne.s32.totalorder %s122, %s123
      %p132 = scmp.eq.s32.totalorder %s16, 0
      %p133 = por %p131, %p132
      %p134 = scmp.ne.s32.totalorder %s122, %s123
      %p135 = scmp.eq.s32.totalorder %s17, 1
      %p136 = por %p134, %p135
      %p138 = scmp.ne.s32.totalorder %s123, %s137
      %p139 = scmp.eq.s32.totalorder %s17, 0
      %p140 = por %p138, %p139
      %s141 = ssub.s32 %s18, %s37
      %s142 = ssub.s32 %s19, %s33
      %s143 = sor.u32 %s141, %s142
      %p144 = scmp.eq.s32.totalorder %s143, 0
      %s146 = sadd.s32 %s145, 1
      %s147 = scalar_select %p144, %s145, %s146
      %p150 = pneg %p144
      %p151 = scmp.eq.s32.totalorder %s11, 1
      %p152 = por %p150, %p151
      %p153 = scmp.ne.s32.totalorder %s145, %s148
      %p154 = scmp.eq.s32.totalorder %s11, 0
      %p155 = por %p153, %p154
      %p156 = scmp.ne.s32.totalorder %s145, %s148
      %p157 = scmp.eq.s32.totalorder %s16, 1
      %p158 = por %p156, %p157
      %p159 = scmp.ne.s32.totalorder %s148, %s149
      %p160 = scmp.eq.s32.totalorder %s16, 0
      %p161 = por %p159, %p160
      %p162 = scmp.ne.s32.totalorder %s148, %s149
      %p163 = scmp.eq.s32.totalorder %s17, 1
      %p164 = por %p162, %p163
      %p166 = scmp.ne.s32.totalorder %s149, %s165
      %p167 = scmp.eq.s32.totalorder %s17, 0
      %p168 = por %p166, %p167
      %p169 = scmp.le.s32.totalorder 1, %s11
      %p170 = scmp.lt.s32.totalorder %s11, 3
      %p171 = pnand %p169, %p170
      %p172 = pneg %p171
      // Predicated region
      $region9: #{decoder_forward.2} parent=5 // pred_check
        _
      $region10: #{decoder_forward.2} parent=5 // pred_check_branch
        %174 = sbr.rel (%p171) target = $region12
      $region11: #{decoder_forward.2} parent=5 // pred_region
        %s175 = ssub.s32 %s11, 1
        // Predicated region
        $region13: #{decoder_forward.2} parent=11 // pred_check
          %p176 = pneg %p133
        $region14: #{decoder_forward.2} parent=11 // pred_check_branch
          %178 = sbr.rel (%p176) target = $region16
        $region15: #{decoder_forward.2} parent=11 // pred_region
          %s180 = ssub.s32 128, 128
          %181 = vsyncadd [#allocation5], %s180
          %s183 = sshll.u32 %s3, 4
          %s184 = int_to_ptr.vmem [resolvable:$true] %s183
          %186 = dma.vmem_to_smem %s184, 128, [#allocation4], [#allocation5]
        $region16: #{decoder_forward.2} parent=11 // pred_fallthru
          _
      $region12: #{decoder_forward.2} parent=5 // pred_fallthru
        _
      %p187 = scmp.lt.s32.totalorder %s11, 2
      // Predicated region
      $region17: #{decoder_forward.2} parent=5 // pred_check
        %p188 = pneg %p187
      $region18: #{decoder_forward.2} parent=5 // pred_check_branch
        %190 = sbr.rel (%p188) target = $region20
      $region19: #{decoder_forward.2} parent=5 // pred_region
        // Predicated region
        $region21: #{decoder_forward.2} parent=19 // pred_check
          %p191 = pneg %p52
        $region22: #{decoder_forward.2} parent=19 // pred_check_branch
          %193 = sbr.rel (%p191) target = $region24
        $region23: #{decoder_forward.2} parent=19 // pred_region
          %p194 = scmp.lt.s32.totalorder %s18, 1
          %s195 = scalar_select %p194, %s18, 1
          %p196 = scmp.lt.s32.totalorder %s19, 0
          %s197 = scalar_select %p196, %s19, 0
          %s198 = sadd.s32 %s197, %s195
          %s199 = smul.addr %s198, 4
          %s200 = scalar_lea.vmem %s0, %s199
        $region24: #{decoder_forward.2} parent=19 // pred_fallthru
          _
        // Predicated region
        $region25: #{decoder_forward.2} parent=19 // pred_check
          %p201 = pneg %p80
        $region26: #{decoder_forward.2} parent=19 // pred_check_branch
          %203 = sbr.rel (%p201) target = $region28
        $region27: #{decoder_forward.2} parent=19 // pred_region
          %p204 = scmp.lt.s32.totalorder %s18, 1
          %s205 = scalar_select %p204, %s18, 1
          %p206 = scmp.lt.s32.totalorder %s20, 0
          %s207 = scalar_select %p206, %s20, 0
          %s208 = sadd.s32 %s207, %s205
          %s209 = smul.addr %s208, 8
          %s210 = scalar_lea.vmem %s1, %s209
        $region28: #{decoder_forward.2} parent=19 // pred_fallthru
          _
        // Predicated region
        $region29: #{decoder_forward.2} parent=19 // pred_check
          %p211 = pneg %p106
        $region30: #{decoder_forward.2} parent=19 // pred_check_branch
          %213 = sbr.rel (%p211) target = $region32
        $region31: #{decoder_forward.2} parent=19 // pred_region
          %p214 = scmp.lt.s32.totalorder %s18, 1
          %s215 = scalar_select %p214, %s18, 1
          %s216 = smul.addr %s215, 64
          %s217 = smul.addr %s216, 8
          %s218 = scalar_lea.vmem %s2, %s217
        $region32: #{decoder_forward.2} parent=19 // pred_fallthru
          _
      $region20: #{decoder_forward.2} parent=5 // pred_fallthru
        _
      %p219 = scmp.le.s32.totalorder 1, %s11
      %p220 = scmp.lt.s32.totalorder %s11, 3
      %p221 = pnand %p219, %p220
      %p222 = pneg %p221
      // Predicated region
      $region33: #{decoder_forward.2} parent=5 // pred_check
        _
      $region34: #{decoder_forward.2} parent=5 // pred_check_branch
        %224 = sbr.rel (%p221) target = $region36
      $region35: #{decoder_forward.2} parent=5 // pred_region
        %s225 = ssub.s32 %s11, 1
        // Predicated region
        $region37: #{decoder_forward.2} parent=35 // pred_check
          %p226 = pneg %p133
        $region38: #{decoder_forward.2} parent=35 // pred_check_branch
          %228 = sbr.rel (%p226) target = $region40
        $region39: #{decoder_forward.2} parent=35 // pred_region
          %229 = dma.done [#allocation5], 128
        $region40: #{decoder_forward.2} parent=35 // pred_fallthru
          _
        %230 = sfence
        %p231 = scmp.lt.s32.totalorder %s21, 1
        %s232 = scalar_select %p231, %s21, 1
        %p233 = scmp.lt.s32.totalorder %s22, 0
        %s234 = scalar_select %p233, %s22, 0
        %s235 = sadd.s32 %s234, %s232
        %s236 = smul.addr %s235, 4
        %s237 = scalar_lea.vmem %s0, %s236
        %p238 = pneg %p58
        %p239 = pneg %p55
        %p240 = scmp.lt.s32.totalorder %s21, 1
        %s241 = scalar_select %p240, %s21, 1
        %p242 = scmp.lt.s32.totalorder %s23, 0
        %s243 = scalar_select %p242, %s23, 0
        %s244 = sadd.s32 %s243, %s241
        %s245 = smul.addr %s244, 8
        %s246 = scalar_lea.vmem %s1, %s245
        %p247 = pneg %p86
        %p248 = pneg %p83
        %p249 = scmp.lt.s32.totalorder %s21, 1
        %s250 = scalar_select %p249, %s21, 1
        %s251 = smul.addr %s250, 64
        %s252 = smul.addr %s251, 8
        %s253 = scalar_lea.vmem %s2, %s252
        %p254 = pneg %p112
        %p255 = pneg %p109
        %p256 = pneg %p133
        %p257 = pneg %p130
        %p258 = pneg %p161
        %p259 = pneg %p158
        %p260 = scmp.lt.s32.totalorder %s21, 1
        %s261 = scalar_select %p260, %s21, 1
        %p262 = scmp.lt.s32.totalorder %s22, 0
        %s263 = scalar_select %p262, %s22, 0
        %s264 = smul.addr %s261, 2
        %s265 = sadd.s32 %s263, %s264
        %s266 = smul.addr %s265, 8
        %s267 = scalar_lea.vmem %s4, %s266
        %p268 = scmp.lt.s32.totalorder %s21, 1
        %s269 = scalar_select %p268, %s21, 1
        %p270 = scmp.lt.s32.totalorder %s22, 0
        %s271 = scalar_select %p270, %s22, 0
        %s272 = sadd.s32 %s271, %s269
        %s273 = smul.addr %s272, 4
        %s274 = scalar_lea.vmem %s0, %s273
        %p275 = scmp.lt.s32.totalorder %s21, 1
        %s276 = scalar_select %p275, %s21, 1
        %p277 = scmp.lt.s32.totalorder %s23, 0
        %s278 = scalar_select %p277, %s23, 0
        %s279 = sadd.s32 %s278, %s276
        %s280 = smul.addr %s279, 8
        %s281 = scalar_lea.vmem %s1, %s280
        %p282 = scmp.lt.s32.totalorder %s21, 1
        %s283 = scalar_select %p282, %s21, 1
        %s284 = smul.addr %s283, 64
        %s285 = smul.addr %s284, 8
        %s286 = scalar_lea.vmem %s2, %s285
        %p287 = scmp.lt.s32.totalorder %s21, 1
        %s288 = scalar_select %p287, %s21, 1
        %p289 = scmp.lt.s32.totalorder %s22, 0
        %s290 = scalar_select %p289, %s22, 0
        %s291 = smul.addr %s288, 2
        %s292 = sadd.s32 %s290, %s291
        %s293 = smul.addr %s292, 8
        %s294 = scalar_lea.vmem %s4, %s293
        %p295 = scmp.eq.s32.totalorder %s23, 0
        // Predicated region
        $region41: #{decoder_forward.2} parent=35 // pred_check
          %p296 = pneg %p295
        $region42: #{decoder_forward.2} parent=35 // pred_check_branch
          %298 = sbr.rel (%p296) target = $region44
        $region43: #{decoder_forward.2} parent=35 // pred_region
          %vm299 = vcmask 64512
          %300 = vst.msk [vmem:[#allocation3] sm:$0xff] %vm299, 0.0
          %301 = vst.msk [vmem:[#allocation3 + $0x8] sm:$0xff] %vm299, 0.0
        $region44: #{decoder_forward.2} parent=35 // pred_fallthru
          _
        %v302 = vld [vmem:[%s274] sm:$0x7]
        %v303 = vld [vmem:[%s281] sm:$0xff]
        %305 = vset.pattern.permute.xlu0 0
        %306 = vperm.xlu0 %305, %v303
        %v307 = vpop.permute.xlu0 %306
        %v309 = vlaneseq
        %v310 = vshrl.u32 %v309, 7
        %v311 = vsub.s32 0, %v310
        %v312 = vrot.slane %v302, %v311
        %v313 = vsub.f32 %v307, %v312
        %v314 = vmul.f32 %v313, %v313
        %315 = vset.pattern.permute.xlu0 1
        %316 = vperm.xlu0 %315, %v303
        %v317 = vpop.permute.xlu0 %316
        %v319 = vlaneseq
        %v320 = vshrl.u32 %v319, 7
        %v321 = vsub.s32 1, %v320
        %v322 = vrot.slane %v302, %v321
        %v323 = vsub.f32 %v317, %v322
        %v324 = vmul.f32 %v323, %v323
        %v325 = vadd.f32 %v314, %v324
        %326 = vset.pattern.permute.xlu0 2
        %327 = vperm.xlu0 %326, %v303
        %v328 = vpop.permute.xlu0 %327
        %v330 = vlaneseq
        %v331 = vshrl.u32 %v330, 7
        %v332 = vsub.s32 2, %v331
        %v333 = vrot.slane %v302, %v332
        %v334 = vsub.f32 %v328, %v333
        %v335 = vmul.f32 %v334, %v334
        %v336 = vadd.f32 %v325, %v335
        %v337 = vrsqrt.pop %v336
        %v338 = vmul.f32 %v336, %v337
        %vm339 = vcmp.eq.f32.partialorder %v336, inf
        %v340 = vsel %vm339, %v336, %v338
        %vm341 = vcmp.eq.f32.partialorder %v336, 0.0
        %v342 = vand.u32 %v336, 2147483648
        %v343 = vsel %vm341, %v342, %v340
        %v344 = vmul.f32 %v343, 2.3333333
        %v345 = vmul.f32 %v344, 1.5707964
        %v346 = vand.u32 2147483647, %v345
        %vm347 = vcmp.le.f32.partialorder %v346, 0.7853982
        %vm348 = vcmp.lt.s32.totalorder %v345, 0
        %v349 = vand.u32 %v345, 2139095040
        %v350 = vshrl.u32 %v349, 23
        %v351 = vsub.s32 %v350, 127
        %v352 = vand.u32 2147483647, %v345
        %v353 = vand.u32 %v352, 8388607
        %v354 = vor.u32 %v353, 8388608
        %v355 = vsub.s32 0, %v354
        %v356 = vadd.s32 %v351, 1
        %vm357 = vcmp.gt.s32.totalorder %v356, 0
        %v358 = vsel %vm357, %v356, 0
        %v359 = vshrl.u32 %v358, 5
        %v360 = vand.u32 %v358, 31
        %v361 = vsub.s32 32, %v360
        %v362 = vshrl.u32 683565275, %v361
        %v363 = vshll.u32 683565275, %v360
        %v364 = vshrl.u32 2475754826, %v361
        %v365 = vor.u32 %v363, %v364
        %v366 = vshll.u32 2475754826, %v360
        %v367 = vshrl.u32 2131351028, %v361
        %v368 = vor.u32 %v366, %v367
        %v369 = vshll.u32 2131351028, %v360
        %v370 = vshrl.u32 2102212464, %v361
        %v371 = vor.u32 %v369, %v370
        %v372 = vshll.u32 2102212464, %v360
        %v373 = vshrl.u32 920167782, %v361
        %v374 = vor.u32 %v372, %v373
        %v375 = vshll.u32 920167782, %v360
        %v376 = vshrl.u32 1326507024, %v361
        %v377 = vor.u32 %v375, %v376
        %vm378 = vcmp.lt.s32.totalorder %v359, 1
        %vm379 = vcmp.lt.s32.totalorder %v359, 2
        %vm380 = vcmp.lt.s32.totalorder %v359, 3
        %vm381 = vcmp.lt.s32.totalorder %v359, 4
        %v382 = vsel %vm378, %v362, %v365
        %v383 = vsel %vm381, %v371, 2102212464
        %v384 = vsel %vm380, %v368, %v383
        %v385 = vsel %vm379, %v382, %v384
        %v386 = vsel %vm378, %v365, %v368
        %v387 = vsel %vm381, %v374, 920167782
        %v388 = vsel %vm380, %v371, %v387
        %v389 = vsel %vm379, %v386, %v388
        %v390 = vsel %vm378, %v368, %v371
        %v391 = vsel %vm381, %v377, 1326507024
        %v392 = vsel %vm380, %v374, %v391
        %v393 = vsel %vm379, %v390, %v392
        %v394 = vshll.u32 %v354, 8
        %v395 = vmul.u32.u64.compose %v394, %v393
        %v396 = vextract.low.u32 %v395
        %v397 = vextract.high.u32 %v395
        %v398 = vmul.u32.u64.compose %v394, %v389
        %v399 = vextract.low.u32 %v398
        %v400 = vextract.high.u32 %v398
        %v401 = vmul.u32 %v394, %v385
        %v402 = vadd.s32 %v397, %v399
        %vm403 = vc.u32 %v397, %v399
        %v404 = vadd.s32 %v400, 1
        %v405 = vsel %vm403, %v404, %v400
        %v406 = vadd.s32 %v401, %v405
        %v407 = vadd.s32 %v406, 536870912
        %v408 = vshrl.u32 %v407, 30
        %v409 = vshll.u32 %v408, 30
        %v410 = vsub.s32 %v406, %v409
        %vm411 = vcmp.lt.s32.totalorder %v410, 0
        %v412 = vsub.s32 0, %v410
        %v413 = vsel %vm411, %v412, %v410
        %v414 = vclz %v413
        %v415 = vsub.s32 %v414, 2
        %vm416 = vcmp.gt.s32.totalorder 0, %v415
        %v417 = vsel %vm416, 0, %v415
        %v418 = vsub.s32 32, %v417
        %v419 = vshll.u32 %v410, %v417
        %v420 = vshrl.u32 %v402, %v418
        %v421 = vor.u32 %v419, %v420
        %v422 = vsub.s32 4294967266, %v417
        %v423 = vadd.s32 %v422, 127
        %v424 = vshll.u32 %v423, 23
        %v425 = vor.u32 4788187, %v424
        %v426 = vand.u32 2147483647, %v425
        %v428 = vcvt.s32.f32 %v421
        %v429 = vmul.f32 %v428, %v426
        %v430 = vxor.u32 %v429, 2147483648
        %v431 = vsel %vm348, %v430, %v429
        %v432 = vsub.s32 4, %v408
        %v433 = vsel %vm348, %v432, %v408
        %v434 = vsel %vm347, %v345, %v431
        %v435 = vsel %vm347, 0, %v433
        %v436 = vcosq.f32.pop %v434
        %v437 = vsinq.f32.pop %v434
        %vm438 = vweird.f32 %v345
        %v439 = vand.u32 %v435, 3
        %vm440 = vcmp.lt.s32.totalorder %v439, 2
        %vm441 = vcmp.eq.s32.totalorder %v439, 0
        %v442 = vxor.u32 %v437, 2147483648
        %v443 = vsel %vm441, %v436, %v442
        %vm444 = vcmp.eq.s32.totalorder %v439, 2
        %v445 = vxor.u32 %v436, 2147483648
        %v446 = vsel %vm444, %v445, %v437
        %v447 = vsel %vm440, %v443, %v446
        %v448 = vsel %vm438, nan, %v447
        %v449 = vmul.f32 %v448, %v448
        %v450 = vand.u32 2147483647, %v344
        %vm451 = vcmp.lt.f32.partialorder %v450, 1.0
        %v452 = vsel %vm451, %v449, 0.0
        %vm453 = vcmask 64512
        %454 = vst.msk [vmem:[#allocation2] sm:$0xff] %vm453, %v452
        %v455 = vsub.f32 1.0, %v449
        %v456 = vsub.f32 %v344, 1.0
        %v457 = vand.u32 2147483647, %v456
        %vm458 = vcmp.lt.f32.partialorder %v457, 1.0
        %v459 = vsel %vm458, %v455, 0.0
        %s460 = scalar_lea.vmem [#allocation2], 8
        %461 = vst.msk [vmem:[%s460] sm:$0xff] %vm453, %v459
        %v462 = vsub.f32 %v344, 2.0
        %v463 = vand.u32 2147483647, %v462
        %vm464 = vcmp.lt.f32.partialorder %v463, 1.0
        %v465 = vsel %vm464, %v449, 0.0
        %s466 = scalar_lea.vmem [#allocation2], 16
        %467 = vst.msk [vmem:[%s466] sm:$0xff] %vm453, %v465
        %v468 = vsub.f32 %v344, 3.0
        %v469 = vand.u32 2147483647, %v468
        %vm470 = vcmp.lt.f32.partialorder %v469, 1.0
        %v471 = vsel %vm470, %v455, 0.0
        %s472 = scalar_lea.vmem [#allocation2], 24
        %473 = vst.msk [vmem:[%s472] sm:$0xff] %vm453, %v471
        %v474 = vsub.f32 %v344, 4.0
        %v475 = vand.u32 2147483647, %v474
        %vm476 = vcmp.lt.f32.partialorder %v475, 1.0
        %v477 = vsel %vm476, %v449, 0.0
        %s478 = scalar_lea.vmem [#allocation2], 32
        %479 = vst.msk [vmem:[%s478] sm:$0xff] %vm453, %v477
        %v480 = vsub.f32 %v344, 5.0
        %v481 = vand.u32 2147483647, %v480
        %vm482 = vcmp.lt.f32.partialorder %v481, 1.0
        %v483 = vsel %vm482, %v455, 0.0
        %s484 = scalar_lea.vmem [#allocation2], 40
        %485 = vst.msk [vmem:[%s484] sm:$0xff] %vm453, %v483
        %v486 = vsub.f32 %v344, 6.0
        %v487 = vand.u32 2147483647, %v486
        %vm488 = vcmp.lt.f32.partialorder %v487, 1.0
        %v489 = vsel %vm488, %v449, 0.0
        %s490 = scalar_lea.vmem [#allocation2], 48
        %491 = vst.msk [vmem:[%s490] sm:$0xff] %vm453, %v489
        %v492 = vsub.f32 %v344, 7.0
        %v493 = vand.u32 2147483647, %v492
        %vm494 = vcmp.lt.f32.partialorder %v493, 1.0
        %v495 = vsel %vm494, %v455, 0.0
        %s496 = scalar_lea.vmem [#allocation2], 56
        %497 = vst.msk [vmem:[%s496] sm:$0xff] %vm453, %v495
        loop: start=0, step=1, limit=32
        $region45: #{decoder_forward.2} parent=35 // loop_pre_header
          _
        $region46: #{decoder_forward.2} parent=35 // loop_header
          %s499 = sphi 0, %s503
          %p500 = scmp.ge.s32.totalorder %s499, 32
        $region47: #{decoder_forward.2} parent=35 // loop_header_branch
          %502 = sbr.rel (%p500) target = $region51
        $region48: #{decoder_forward.2} parent=35 // loop_body
          loop: start=0, step=1, limit=8
          $region52: #{decoder_forward.2} parent=48 // loop_pre_header
            _
          $region53: #{decoder_forward.2} parent=48 // loop_header
            %s505 = sphi 0, %s509
            %p506 = scmp.ge.s32.totalorder %s505, 8
            %v510 = vphi 0.0, %v524
          $region54: #{decoder_forward.2} parent=48 // loop_header_branch
            %508 = sbr.rel (%p506) target = $region58
          $region55: #{decoder_forward.2} parent=48 // loop_body
            %s511 = smul.u32 %s505, 8
            %s512 = scalar_lea.vmem [#allocation2], %s511
            %v513 = vld [vmem:[%s512] sm:$0xff]
            %s514 = sshra.s32 %s499, 7
            %s515 = sand.u32 %s499, 127
            %s516 = sadd.s32 %s514, %s505
            %s517 = smul.u32 %s516, 128
            %s518 = sshra.s32 %s499, 7
            %s519 = sand.u32 %s499, 127
            %s520 = sadd.s32 %s517, %s519
            %s521 = sld [smem:[#allocation4 + %s520]]
            %v522 = vstv %s521
            %v523 = vmul.f32 %v513, %v522
            %v524 = vadd.f32 %v510, %v523
          $region56: #{decoder_forward.2} parent=48 // loop_footer
            %s509 = sadd.s32 1, %s505
          $region57: #{decoder_forward.2} parent=48 // loop_footer_branch
            %504 = sbr.rel target = $region53
          $region58: #{decoder_forward.2} parent=48 // loop_exit
            _
          %v525 = vmax.f32 %v510, 0.0
          %s526 = smul.u32 %s499, 16
          %s527 = scalar_lea.vmem %s286, %s526
          %v528 = vld [vmem:[%s527] sm:$0xff]
          %v529 = vld [vmem:[%s527 + $0x8] sm:$0xff]
          %v530 = vld [vmem:[#allocation3] sm:$0xff]
          %v531 = vld [vmem:[#allocation3 + $0x8] sm:$0xff]
          %v533 = vsel %vm453, %v528, 0
          %v536 = vsel %vm453, %v529, 0
          %538 = vmatprep.subr.mxu0 0.0
          %539 = vmatpush1.msra.mxu0 %v525
          %540 = vmatprep.subr.mxu0 0.0
          %541 = vmatpush1.msra.mxu0 0.0
          %542 = vmatprep.subr.mxu0 0.0
          %543 = vmatpush1.msra.mxu0 0.0
          %544 = vmatprep.subr.mxu0 0.0
          %545 = vmatpush1.msra.mxu0 0.0
          %546 = vmatprep.subr.mxu0 0.0
          %547 = vmatpush1.msra.mxu0 0.0
          %548 = vmatprep.subr.mxu0 0.0
          %549 = vmatpush1.msra.mxu0 0.0
          %550 = vmatprep.subr.mxu0 0.0
          %551 = vmatpush1.msra.mxu0 0.0
          %552 = vmatprep.subr.mxu0 0.0
          %553 = vmatpush1.msra.mxu0 0.0
          %554 = vmatprep.subr.mxu0 0.0
          %555 = vmatpush1.msra.mxu0 0.0
          %556 = vmatprep.subr.mxu0 0.0
          %557 = vmatpush1.msra.mxu0 0.0
          %558 = vmatprep.subr.mxu0 0.0
          %559 = vmatpush1.msra.mxu0 0.0
          %560 = vmatprep.subr.mxu0 0.0
          %561 = vmatpush1.msra.mxu0 0.0
          %562 = vmatprep.subr.mxu0 0.0
          %563 = vmatpush1.msra.mxu0 0.0
          %564 = vmatprep.subr.mxu0 0.0
          %565 = vmatpush1.msra.mxu0 0.0
          %566 = vmatprep.subr.mxu0 0.0
          %567 = vmatpush1.msra.mxu0 0.0
          %568 = vmatprep.subr.mxu0 0.0
          %569 = vmatpush1.msra.mxu0 0.0
          %570 = vmatprep.subr.mxu0 0.0
          %571 = vmatpush1.msra.mxu0 0.0
          %572 = vmatprep.subr.mxu0 0.0
          %573 = vmatpush1.msra.mxu0 0.0
          %574 = vmatprep.subr.mxu0 0.0
          %575 = vmatpush1.msra.mxu0 0.0
          %576 = vmatprep.subr.mxu0 0.0
          %577 = vmatpush1.msra.mxu0 0.0
          %578 = vmatprep.subr.mxu0 0.0
          %579 = vmatpush1.msra.mxu0 0.0
          %580 = vmatprep.subr.mxu0 0.0
          %581 = vmatpush1.msra.mxu0 0.0
          %582 = vmatprep.subr.mxu0 0.0
          %583 = vmatpush1.msra.mxu0 0.0
          %584 = vmatprep.subr.mxu0 0.0
          %585 = vmatpush1.msra.mxu0 0.0
          %586 = vmatprep.subr.mxu0 0.0
          %587 = vmatpush1.msra.mxu0 0.0
          %588 = vmatprep.subr.mxu0 0.0
          %589 = vmatpush1.msra.mxu0 0.0
          %590 = vmatprep.subr.mxu0 0.0
          %591 = vmatpush1.msra.mxu0 0.0
          %592 = vmatprep.subr.mxu0 0.0
          %593 = vmatpush1.msra.mxu0 0.0
          %594 = vmatprep.subr.mxu0 0.0
          %595 = vmatpush1.msra.mxu0 0.0
          %596 = vmatprep.subr.mxu0 0.0
          %597 = vmatpush1.msra.mxu0 0.0
          %598 = vmatprep.subr.mxu0 0.0
          %599 = vmatpush1.msra.mxu0 0.0
          %600 = vmatprep.subr.mxu0 0.0
          %601 = vmatpush1.msra.mxu0 0.0
          %602 = vmatprep.mubr.f32.mxu0 0.0
          %603 = vmatmul.mubr.f32.gmra.mrb[0].mxu0 %v533
          %v604 = vpop.f32.mrb[0].mxu0
          %v605 = vadd.f32 0.0, %v604
          %v606 = vpop.f32.mrb[0].mxu0
          %607 = vmatprep.mubr.f32.mxu0 0.0
          %608 = vmatmul.mubr.f32.gmra.mrb[0].mxu0 %v536
          %v609 = vpop.f32.mrb[0].mxu0
          %v610 = vadd.f32 0.0, %v609
          %v611 = vpop.f32.mrb[0].mxu0
          %612 = vdwg.mxu0
          %v613 = vadd.f32 %v530, %v605
          %v614 = vadd.f32 %v531, %v610
          %615 = vst.msk [vmem:[#allocation3] sm:$0xff] %vm453, %v613
          %616 = vst.msk [vmem:[#allocation3 + $0x8] sm:$0xff] %vm453, %v614
        $region49: #{decoder_forward.2} parent=35 // loop_footer
          %s503 = sadd.s32 1, %s499
        $region50: #{decoder_forward.2} parent=35 // loop_footer_branch
          %498 = sbr.rel target = $region46
        $region51: #{decoder_forward.2} parent=35 // loop_exit
          _
        // Predicated region
        $region59: #{decoder_forward.2} parent=35 // pred_check
          %p617 = pneg %p295
        $region60: #{decoder_forward.2} parent=35 // pred_check_branch
          %619 = sbr.rel (%p617) target = $region62
        $region61: #{decoder_forward.2} parent=35 // pred_region
          %v620 = vld [vmem:[#allocation3] sm:$0xff]
          %v621 = vld [vmem:[#allocation3 + $0x8] sm:$0xff]
          %v622 = vmax.f32 %v620, 0.0
          %v623 = vmax.f32 %v621, 0.0
          %624 = vst.msk [vmem:[%s294] sm:$0xff] %vm453, %v622
          %625 = vst.msk [vmem:[%s294 + $0x8] sm:$0xff] %vm453, %v623
        $region62: #{decoder_forward.2} parent=35 // pred_fallthru
          _
        %p626 = scmp.lt.s32.totalorder %s21, 1
        %s627 = scalar_select %p626, %s21, 1
        %p628 = scmp.lt.s32.totalorder %s22, 0
        %s629 = scalar_select %p628, %s22, 0
        %s630 = smul.addr %s627, 2
        %s631 = sadd.s32 %s629, %s630
        %s632 = smul.addr %s631, 8
        %s633 = scalar_lea.vmem %s4, %s632
        // Predicated region
        $region63: #{decoder_forward.2} parent=35 // pred_check
          %p634 = pneg %p158
        $region64: #{decoder_forward.2} parent=35 // pred_check_branch
          %636 = sbr.rel (%p634) target = $region66
        $region65: #{decoder_forward.2} parent=35 // pred_region
          _
        $region66: #{decoder_forward.2} parent=35 // pred_fallthru
          _
      $region36: #{decoder_forward.2} parent=5 // pred_fallthru
        _
      %p637 = scmp.le.s32.totalorder 2, %s11
      // Predicated region
      $region67: #{decoder_forward.2} parent=5 // pred_check
        %p638 = pneg %p637
      $region68: #{decoder_forward.2} parent=5 // pred_check_branch
        %640 = sbr.rel (%p638) target = $region70
      $region69: #{decoder_forward.2} parent=5 // pred_region
        %s641 = ssub.s32 %s11, 2
        // Predicated region
        $region71: #{decoder_forward.2} parent=69 // pred_check
          %p642 = pneg %p164
        $region72: #{decoder_forward.2} parent=69 // pred_check_branch
          %644 = sbr.rel (%p642) target = $region74
        $region73: #{decoder_forward.2} parent=69 // pred_region
          %p645 = scmp.lt.s32.totalorder %s24, 1
          %s646 = scalar_select %p645, %s24, 1
          %p647 = scmp.lt.s32.totalorder %s25, 0
          %s648 = scalar_select %p647, %s25, 0
          %s649 = smul.addr %s646, 2
          %s650 = sadd.s32 %s648, %s649
          %s651 = smul.addr %s650, 8
          %s652 = scalar_lea.vmem %s4, %s651
        $region74: #{decoder_forward.2} parent=69 // pred_fallthru
          _
      $region70: #{decoder_forward.2} parent=5 // pred_fallthru
        _
    $region6: #{decoder_forward.2} parent=1 // loop_footer
      %s15 = sadd.s32 1, %s11
    $region7: #{decoder_forward.2} parent=1 // loop_footer_branch
      %10 = sbr.rel target = $region3
    $region8: #{decoder_forward.2} parent=1 // loop_exit
      _
    %653 = vsyncpa [#allocation5], 1
    %s654 = scalar_lea.sflag [#allocation5], 1
    %655 = vsyncpa %s654, 1

// kernel: decoder_forward.3
$region0: #{decoder_forward.3}
  #allocation0 [shape = 'u32[]', space=smem, size = 0x4, offset = 0x4, fixed_abs, tag = 'smem constant byte address 0x4 - core index']
  #allocation1 [shape = 'u32[144,128]{1,0:T(1,128)}', space=vmem, size = 0x12000, scoped, tag = 'internal scratch']
  #allocation2 [shape = 'f32[8,8,8]{2,1,0:T(8,128)}', space=vmem, size = 0x8000, scoped, tag = 'scratch operand']
  #allocation3 [shape = 'f32[8,8]{1,0:T(8,128)}', space=vmem, size = 0x1000, scoped, tag = 'scratch operand']
  %s0 = inlined_call_operand.vmem [shape: f32[2,3,8], index: 0, kind: input, shape index: {}]
  %s1 = inlined_call_operand.vmem [shape: f32[2,8,3], index: 1, kind: input, shape index: {}]
  %s2 = inlined_call_operand.vmem [shape: f32[2,32,8,8], index: 2, kind: input, shape index: {}]
  %s3 = inlined_call_operand.vmem [shape: f32[8,32], index: 3, kind: input, shape index: {}]
  %s4 = inlined_call_operand.vmem [shape: f32[2,8,8], index: 4, kind: output, shape index: {}]
  %s5 = sld [smem:[#allocation0]]
  $region75: #{decoder_forward.3} parent=0
    _
  %s7 = ssub.s32 1, %s5
  %s8 = scalar_select 0, %s7, %s5
  $region1: #{decoder_forward.3} parent=0
    #allocation4 [shape = 'u8[4096]{0}', space=smem, size = 0x1000, scoped, tag = 'input window, operand 3, single buffered']
    #allocation5 [shape = 's32[2]{0}', space=sflag, size = 0x8, scoped, tag = 'scoped memory for decoder_forward.3']
    %9 = vsyncpa [#allocation5], 0
    loop: start=0, step=1, limit=4
    $region2: #{decoder_forward.3} parent=1 // loop_pre_header
      _
    $region3: #{decoder_forward.3} parent=1 // loop_header
      %s11 = sphi 0, %s15
      %p12 = scmp.ge.s32.totalorder %s11, 4
      %s18 = sphi 0, %s37
      %s19 = sphi 0, %s33
      %s20 = sphi 0, %s29
      %s21 = sphi 0, %s18
      %s22 = sphi 0, %s19
      %s23 = sphi 0, %s20
      %s24 = sphi 0, %s21
      %s25 = sphi 0, %s22
      %s26 = sphi 0, %s23
      %s42 = sphi 0, %s44
      %s45 = sphi 0, %s42
      %s46 = sphi 0, %s45
      %s62 = sphi 0, %s46
      %s70 = sphi 0, %s72
      %s73 = sphi 0, %s70
      %s74 = sphi 0, %s73
      %s90 = sphi 0, %s74
      %s96 = sphi 0, %s98
      %s99 = sphi 0, %s96
      %s100 = sphi 0, %s99
      %s116 = sphi 0, %s100
      %s120 = sphi 0, %s120
      %s122 = sphi 0, %s120
      %s123 = sphi 0, %s122
      %s137 = sphi 0, %s123
      %s145 = sphi 0, %s147
      %s148 = sphi 0, %s145
      %s149 = sphi 0, %s148
      %s165 = sphi 0, %s149
    $region4: #{decoder_forward.3} parent=1 // loop_header_branch
      %14 = sbr.rel (%p12) target = $region8
    $region5: #{decoder_forward.3} parent=1 // loop_body
      %s16 = ssub.s32 %s11, 1
      %s17 = ssub.s32 %s11, 2
      %s27 = sadd.s32 1, %s20
      %p28 = scmp.ge.s32.totalorder %s27, 1
      %s29 = scalar_select %p28, 0, %s27
      %s30 = sadd.s32 1, %s19
      %s31 = scalar_select %p28, %s30, %s19
      %p32 = scmp.ge.s32.totalorder %s31, 1
      %s33 = scalar_select %p32, 0, %s31
      %s34 = sadd.s32 1, %s18
      %s35 = scalar_select %p32, %s34, %s18
      %p36 = scmp.ge.s32.totalorder %s35, 2
      %s37 = scalar_select %p36, 0, %s35
      %s38 = ssub.s32 %s18, %s37
      %s39 = ssub.s32 %s19, %s33
      %s40 = sor.u32 %s38, %s39
      %p41 = scmp.eq.s32.totalorder %s40, 0
      %s43 = sadd.s32 %s42, 1
      %s44 = scalar_select %p41, %s42, %s43
      %p47 = pneg %p41
      %p48 = scmp.eq.s32.totalorder %s11, 1
      %p49 = por %p47, %p48
      %p50 = scmp.ne.s32.totalorder %s42, %s45
      %p51 = scmp.eq.s32.totalorder %s11, 0
      %p52 = por %p50, %p51
      %p53 = scmp.ne.s32.totalorder %s42, %s45
      %p54 = scmp.eq.s32.totalorder %s16, 1
      %p55 = por %p53, %p54
      %p56 = scmp.ne.s32.totalorder %s45, %s46
      %p57 = scmp.eq.s32.totalorder %s16, 0
      %p58 = por %p56, %p57
      %p59 = scmp.ne.s32.totalorder %s45, %s46
      %p60 = scmp.eq.s32.totalorder %s17, 1
      %p61 = por %p59, %p60
      %p63 = scmp.ne.s32.totalorder %s46, %s62
      %p64 = scmp.eq.s32.totalorder %s17, 0
      %p65 = por %p63, %p64
      %s66 = ssub.s32 %s18, %s37
      %s67 = ssub.s32 %s20, %s29
      %s68 = sor.u32 %s66, %s67
      %p69 = scmp.eq.s32.totalorder %s68, 0
      %s71 = sadd.s32 %s70, 1
      %s72 = scalar_select %p69, %s70, %s71
      %p75 = pneg %p69
      %p76 = scmp.eq.s32.totalorder %s11, 1
      %p77 = por %p75, %p76
      %p78 = scmp.ne.s32.totalorder %s70, %s73
      %p79 = scmp.eq.s32.totalorder %s11, 0
      %p80 = por %p78, %p79
      %p81 = scmp.ne.s32.totalorder %s70, %s73
      %p82 = scmp.eq.s32.totalorder %s16, 1
      %p83 = por %p81, %p82
      %p84 = scmp.ne.s32.totalorder %s73, %s74
      %p85 = scmp.eq.s32.totalorder %s16, 0
      %p86 = por %p84, %p85
      %p87 = scmp.ne.s32.totalorder %s73, %s74
      %p88 = scmp.eq.s32.totalorder %s17, 1
      %p89 = por %p87, %p88
      %p91 = scmp.ne.s32.totalorder %s74, %s90
      %p92 = scmp.eq.s32.totalorder %s17, 0
      %p93 = por %p91, %p92
      %s94 = ssub.s32 %s18, %s37
      %p95 = scmp.eq.s32.totalorder %s94, 0
      %s97 = sadd.s32 %s96, 1
      %s98 = scalar_select %p95, %s96, %s97
      %p101 = pneg %p95
      %p102 = scmp.eq.s32.totalorder %s11, 1
      %p103 = por %p101, %p102
      %p104 = scmp.ne.s32.totalorder %s96, %s99
      %p105 = scmp.eq.s32.totalorder %s11, 0
      %p106 = por %p104, %p105
      %p107 = scmp.ne.s32.totalorder %s96, %s99
      %p108 = scmp.eq.s32.totalorder %s16, 1
      %p109 = por %p107, %p108
      %p110 = scmp.ne.s32.totalorder %s99, %s100
      %p111 = scmp.eq.s32.totalorder %s16, 0
      %p112 = por %p110, %p111
      %p113 = scmp.ne.s32.totalorder %s99, %s100
      %p114 = scmp.eq.s32.totalorder %s17, 1
      %p115 = por %p113, %p114
      %p117 = scmp.ne.s32.totalorder %s100, %s116
      %p118 = scmp.eq.s32.totalorder %s17, 0
      %p119 = por %p117, %p118
      %s121 = sadd.s32 %s120, 1
      %p124 = scmp.eq.s32.totalorder %s11, 1
      %p125 = scmp.ne.s32.totalorder %s120, %s122
      %p126 = scmp.eq.s32.totalorder %s11, 0
      %p127 = por %p125, %p126
      %p128 = scmp.ne.s32.totalorder %s120, %s122
      %p129 = scmp.eq.s32.totalorder %s16, 1
      %p130 = por %p128, %p129
      %p131 = scmp.ne.s32.totalorder %s122, %s123
      %p132 = scmp.eq.s32.totalorder %s16, 0
      %p133 = por %p131, %p132
      %p134 = scmp.ne.s32.totalorder %s122, %s123
      %p135 = scmp.eq.s32.totalorder %s17, 1
      %p136 = por %p134, %p135
      %p138 = scmp.ne.s32.totalorder %s123, %s137
      %p139 = scmp.eq.s32.totalorder %s17, 0
      %p140 = por %p138, %p139
      %s141 = ssub.s32 %s18, %s37
      %s142 = ssub.s32 %s19, %s33
      %s143 = sor.u32 %s141, %s142
      %p144 = scmp.eq.s32.totalorder %s143, 0
      %s146 = sadd.s32 %s145, 1
      %s147 = scalar_select %p144, %s145, %s146
      %p150 = pneg %p144
      %p151 = scmp.eq.s32.totalorder %s11, 1
      %p152 = por %p150, %p151
      %p153 = scmp.ne.s32.totalorder %s145, %s148
      %p154 = scmp.eq.s32.totalorder %s11, 0
      %p155 = por %p153, %p154
      %p156 = scmp.ne.s32.totalorder %s145, %s148
      %p157 = scmp.eq.s32.totalorder %s16, 1
      %p158 = por %p156, %p157
      %p159 = scmp.ne.s32.totalorder %s148, %s149
      %p160 = scmp.eq.s32.totalorder %s16, 0
      %p161 = por %p159, %p160
      %p162 = scmp.ne.s32.totalorder %s148, %s149
      %p163 = scmp.eq.s32.totalorder %s17, 1
      %p164 = por %p162, %p163
      %p166 = scmp.ne.s32.totalorder %s149, %s165
      %p167 = scmp.eq.s32.totalorder %s17, 0
      %p168 = por %p166, %p167
      %p169 = scmp.le.s32.totalorder 1, %s11
      %p170 = scmp.lt.s32.totalorder %s11, 3
      %p171 = pnand %p169, %p170
      %p172 = pneg %p171
      // Predicated region
      $region9: #{decoder_forward.3} parent=5 // pred_check
        _
      $region10: #{decoder_forward.3} parent=5 // pred_check_branch
        %174 = sbr.rel (%p171) target = $region12
      $region11: #{decoder_forward.3} parent=5 // pred_region
        %s175 = ssub.s32 %s11, 1
        // Predicated region
        $region13: #{decoder_forward.3} parent=11 // pred_check
          %p176 = pneg %p133
        $region14: #{decoder_forward.3} parent=11 // pred_check_branch
          %178 = sbr.rel (%p176) target = $region16
        $region15: #{decoder_forward.3} parent=11 // pred_region
          %s180 = ssub.s32 128, 128
          %181 = vsyncadd [#allocation5], %s180
          %s183 = sshll.u32 %s3, 4
          %s184 = int_to_ptr.vmem [resolvable:$true] %s183
          %186 = dma.vmem_to_smem %s184, 128, [#allocation4], [#allocation5]
        $region16: #{decoder_forward.3} parent=11 // pred_fallthru
          _
      $region12: #{decoder_forward.3} parent=5 // pred_fallthru
        _
      %p187 = scmp.lt.s32.totalorder %s11, 2
      // Predicated region
      $region17: #{decoder_forward.3} parent=5 // pred_check
        %p188 = pneg %p187
      $region18: #{decoder_forward.3} parent=5 // pred_check_branch
        %190 = sbr.rel (%p188) target = $region20
      $region19: #{decoder_forward.3} parent=5 // pred_region
        // Predicated region
        $region21: #{decoder_forward.3} parent=19 // pred_check
          %p191 = pneg %p52
        $region22: #{decoder_forward.3} parent=19 // pred_check_branch
          %193 = sbr.rel (%p191) target = $region24
        $region23: #{decoder_forward.3} parent=19 // pred_region
          %p194 = scmp.lt.s32.totalorder %s18, 1
          %s195 = scalar_select %p194, %s18, 1
          %p196 = scmp.lt.s32.totalorder %s19, 0
          %s197 = scalar_select %p196, %s19, 0
          %s198 = sadd.s32 %s197, %s195
          %s199 = smul.addr %s198, 4
          %s200 = scalar_lea.vmem %s0, %s199
        $region24: #{decoder_forward.3} parent=19 // pred_fallthru
          _
        // Predicated region
        $region25: #{decoder_forward.3} parent=19 // pred_check
          %p201 = pneg %p80
        $region26: #{decoder_forward.3} parent=19 // pred_check_branch
          %203 = sbr.rel (%p201) target = $region28
        $region27: #{decoder_forward.3} parent=19 // pred_region
          %p204 = scmp.lt.s32.totalorder %s18, 1
          %s205 = scalar_select %p204, %s18, 1
          %p206 = scmp.lt.s32.totalorder %s20, 0
          %s207 = scalar_select %p206, %s20, 0
          %s208 = sadd.s32 %s207, %s205
          %s209 = smul.addr %s208, 8
          %s210 = scalar_lea.vmem %s1, %s209
        $region28: #{decoder_forward.3} parent=19 // pred_fallthru
          _
        // Predicated region
        $region29: #{decoder_forward.3} parent=19 // pred_check
          %p211 = pneg %p106
        $region30: #{decoder_forward.3} parent=19 // pred_check_branch
          %213 = sbr.rel (%p211) target = $region32
        $region31: #{decoder_forward.3} parent=19 // pred_region
          %p214 = scmp.lt.s32.totalorder %s18, 1
          %s215 = scalar_select %p214, %s18, 1
          %s216 = smul.addr %s215, 32
          %s217 = smul.addr %s216, 8
          %s218 = scalar_lea.vmem %s2, %s217
        $region32: #{decoder_forward.3} parent=19 // pred_fallthru
          _
      $region20: #{decoder_forward.3} parent=5 // pred_fallthru
        _
      %p219 = scmp.le.s32.totalorder 1, %s11
      %p220 = scmp.lt.s32.totalorder %s11, 3
      %p221 = pnand %p219, %p220
      %p222 = pneg %p221
      // Predicated region
      $region33: #{decoder_forward.3} parent=5 // pred_check
        _
      $region34: #{decoder_forward.3} parent=5 // pred_check_branch
        %224 = sbr.rel (%p221) target = $region36
      $region35: #{decoder_forward.3} parent=5 // pred_region
        %s225 = ssub.s32 %s11, 1
        // Predicated region
        $region37: #{decoder_forward.3} parent=35 // pred_check
          %p226 = pneg %p133
        $region38: #{decoder_forward.3} parent=35 // pred_check_branch
          %228 = sbr.rel (%p226) target = $region40
        $region39: #{decoder_forward.3} parent=35 // pred_region
          %229 = dma.done [#allocation5], 128
        $region40: #{decoder_forward.3} parent=35 // pred_fallthru
          _
        %230 = sfence
        %p231 = scmp.lt.s32.totalorder %s21, 1
        %s232 = scalar_select %p231, %s21, 1
        %p233 = scmp.lt.s32.totalorder %s22, 0
        %s234 = scalar_select %p233, %s22, 0
        %s235 = sadd.s32 %s234, %s232
        %s236 = smul.addr %s235, 4
        %s237 = scalar_lea.vmem %s0, %s236
        %p238 = pneg %p58
        %p239 = pneg %p55
        %p240 = scmp.lt.s32.totalorder %s21, 1
        %s241 = scalar_select %p240, %s21, 1
        %p242 = scmp.lt.s32.totalorder %s23, 0
        %s243 = scalar_select %p242, %s23, 0
        %s244 = sadd.s32 %s243, %s241
        %s245 = smul.addr %s244, 8
        %s246 = scalar_lea.vmem %s1, %s245
        %p247 = pneg %p86
        %p248 = pneg %p83
        %p249 = scmp.lt.s32.totalorder %s21, 1
        %s250 = scalar_select %p249, %s21, 1
        %s251 = smul.addr %s250, 32
        %s252 = smul.addr %s251, 8
        %s253 = scalar_lea.vmem %s2, %s252
        %p254 = pneg %p112
        %p255 = pneg %p109
        %p256 = pneg %p133
        %p257 = pneg %p130
        %p258 = pneg %p161
        %p259 = pneg %p158
        %p260 = scmp.lt.s32.totalorder %s21, 1
        %s261 = scalar_select %p260, %s21, 1
        %p262 = scmp.lt.s32.totalorder %s22, 0
        %s263 = scalar_select %p262, %s22, 0
        %s264 = sadd.s32 %s263, %s261
        %s265 = smul.addr %s264, 8
        %s266 = scalar_lea.vmem %s4, %s265
        %p267 = scmp.lt.s32.totalorder %s21, 1
        %s268 = scalar_select %p267, %s21, 1
        %p269 = scmp.lt.s32.totalorder %s22, 0
        %s270 = scalar_select %p269, %s22, 0
        %s271 = sadd.s32 %s270, %s268
        %s272 = smul.addr %s271, 4
        %s273 = scalar_lea.vmem %s0, %s272
        %p274 = scmp.lt.s32.totalorder %s21, 1
        %s275 = scalar_select %p274, %s21, 1
        %p276 = scmp.lt.s32.totalorder %s23, 0
        %s277 = scalar_select %p276, %s23, 0
        %s278 = sadd.s32 %s277, %s275
        %s279 = smul.addr %s278, 8
        %s280 = scalar_lea.vmem %s1, %s279
        %p281 = scmp.lt.s32.totalorder %s21, 1
        %s282 = scalar_select %p281, %s21, 1
        %s283 = smul.addr %s282, 32
        %s284 = smul.addr %s283, 8
        %s285 = scalar_lea.vmem %s2, %s284
        %p286 = scmp.lt.s32.totalorder %s21, 1
        %s287 = scalar_select %p286, %s21, 1
        %p288 = scmp.lt.s32.totalorder %s22, 0
        %s289 = scalar_select %p288, %s22, 0
        %s290 = sadd.s32 %s289, %s287
        %s291 = smul.addr %s290, 8
        %s292 = scalar_lea.vmem %s4, %s291
        %p293 = scmp.eq.s32.totalorder %s23, 0
        // Predicated region
        $region41: #{decoder_forward.3} parent=35 // pred_check
          %p294 = pneg %p293
        $region42: #{decoder_forward.3} parent=35 // pred_check_branch
          %296 = sbr.rel (%p294) target = $region44
        $region43: #{decoder_forward.3} parent=35 // pred_region
          %vm297 = vcmask 64512
          %298 = vst.msk [vmem:[#allocation3] sm:$0xff] %vm297, 0.0
        $region44: #{decoder_forward.3} parent=35 // pred_fallthru
          _
        %v299 = vld [vmem:[%s273] sm:$0x7]
        %v300 = vld [vmem:[%s280] sm:$0xff]
        %302 = vset.pattern.permute.xlu0 0
        %303 = vperm.xlu0 %302, %v300
        %v304 = vpop.permute.xlu0 %303
        %v306 = vlaneseq
        %v307 = vshrl.u32 %v306, 7
        %v308 = vsub.s32 0, %v307
        %v309 = vrot.slane %v299, %v308
        %v310 = vsub.f32 %v304, %v309
        %v311 = vmul.f32 %v310, %v310
        %312 = vset.pattern.permute.xlu0 1
        %313 = vperm.xlu0 %312, %v300
        %v314 = vpop.permute.xlu0 %313
        %v316 = vlaneseq
        %v317 = vshrl.u32 %v316, 7
        %v318 = vsub.s32 1, %v317
        %v319 = vrot.slane %v299, %v318
        %v320 = vsub.f32 %v314, %v319
        %v321 = vmul.f32 %v320, %v320
        %v322 = vadd.f32 %v311, %v321
        %323 = vset.pattern.permute.xlu0 2
        %324 = vperm.xlu0 %323, %v300
        %v325 = vpop.permute.xlu0 %324
        %v327 = vlaneseq
        %v328 = vshrl.u32 %v327, 7
        %v329 = vsub.s32 2, %v328
        %v330 = vrot.slane %v299, %v329
        %v331 = vsub.f32 %v325, %v330
        %v332 = vmul.f32 %v331, %v331
        %v333 = vadd.f32 %v322, %v332
        %v334 = vrsqrt.pop %v333
        %v335 = vmul.f32 %v333, %v334
        %vm336 = vcmp.eq.f32.partialorder %v333, inf
        %v337 = vsel %vm336, %v333, %v335
        %vm338 = vcmp.eq.f32.partialorder %v333, 0.0
        %v339 = vand.u32 %v333, 2147483648
        %v340 = vsel %vm338, %v339, %v337
        %v341 = vmul.f32 %v340, 2.3333333
        %v342 = vmul.f32 %v341, 1.5707964
        %v343 = vand.u32 2147483647, %v342
        %vm344 = vcmp.le.f32.partialorder %v343, 0.7853982
        %vm345 = vcmp.lt.s32.totalorder %v342, 0
        %v346 = vand.u32 %v342, 2139095040
        %v347 = vshrl.u32 %v346, 23
        %v348 = vsub.s32 %v347, 127
        %v349 = vand.u32 2147483647, %v342
        %v350 = vand.u32 %v349, 8388607
        %v351 = vor.u32 %v350, 8388608
        %v352 = vsub.s32 0, %v351
        %v353 = vadd.s32 %v348, 1
        %vm354 = vcmp.gt.s32.totalorder %v353, 0
        %v355 = vsel %vm354, %v353, 0
        %v356 = vshrl.u32 %v355, 5
        %v357 = vand.u32 %v355, 31
        %v358 = vsub.s32 32, %v357
        %v359 = vshrl.u32 683565275, %v358
        %v360 = vshll.u32 683565275, %v357
        %v361 = vshrl.u32 2475754826, %v358
        %v362 = vor.u32 %v360, %v361
        %v363 = vshll.u32 2475754826, %v357
        %v364 = vshrl.u32 2131351028, %v358
        %v365 = vor.u32 %v363, %v364
        %v366 = vshll.u32 2131351028, %v357
        %v367 = vshrl.u32 2102212464, %v358
        %v368 = vor.u32 %v366, %v367
        %v369 = vshll.u32 2102212464, %v357
        %v370 = vshrl.u32 920167782, %v358
        %v371 = vor.u32 %v369, %v370
        %v372 = vshll.u32 920167782, %v357
        %v373 = vshrl.u32 1326507024, %v358
        %v374 = vor.u32 %v372, %v373
        %vm375 = vcmp.lt.s32.totalorder %v356, 1
        %vm376 = vcmp.lt.s32.totalorder %v356, 2
        %vm377 = vcmp.lt.s32.totalorder %v356, 3
        %vm378 = vcmp.lt.s32.totalorder %v356, 4
        %v379 = vsel %vm375, %v359, %v362
        %v380 = vsel %vm378, %v368, 2102212464
        %v381 = vsel %vm377, %v365, %v380
        %v382 = vsel %vm376, %v379, %v381
        %v383 = vsel %vm375, %v362, %v365
        %v384 = vsel %vm378, %v371, 920167782
        %v385 = vsel %vm377, %v368, %v384
        %v386 = vsel %vm376, %v383, %v385
        %v387 = vsel %vm375, %v365, %v368
        %v388 = vsel %vm378, %v374, 1326507024
        %v389 = vsel %vm377, %v371, %v388
        %v390 = vsel %vm376, %v387, %v389
        %v391 = vshll.u32 %v351, 8
        %v392 = vmul.u32.u64.compose %v391, %v390
        %v393 = vextract.low.u32 %v392
        %v394 = vextract.high.u32 %v392
        %v395 = vmul.u32.u64.compose %v391, %v386
        %v396 = vextract.low.u32 %v395
        %v397 = vextract.high.u32 %v395
        %v398 = vmul.u32 %v391, %v382
        %v399 = vadd.s32 %v394, %v396
        %vm400 = vc.u32 %v394, %v396
        %v401 = vadd.s32 %v397, 1
        %v402 = vsel %vm400, %v401, %v397
        %v403 = vadd.s32 %v398, %v402
        %v404 = vadd.s32 %v403, 536870912
        %v405 = vshrl.u32 %v404, 30
        %v406 = vshll.u32 %v405, 30
        %v407 = vsub.s32 %v403, %v406
        %vm408 = vcmp.lt.s32.totalorder %v407, 0
        %v409 = vsub.s32 0, %v407
        %v410 = vsel %vm408, %v409, %v407
        %v411 = vclz %v410
        %v412 = vsub.s32 %v411, 2
        %vm413 = vcmp.gt.s32.totalorder 0, %v412
        %v414 = vsel %vm413, 0, %v412
        %v415 = vsub.s32 32, %v414
        %v416 = vshll.u32 %v407, %v414
        %v417 = vshrl.u32 %v399, %v415
        %v418 = vor.u32 %v416, %v417
        %v419 = vsub.s32 4294967266, %v414
        %v420 = vadd.s32 %v419, 127
        %v421 = vshll.u32 %v420, 23
        %v422 = vor.u32 4788187, %v421
        %v423 = vand.u32 2147483647, %v422
        %v425 = vcvt.s32.f32 %v418
        %v426 = vmul.f32 %v425, %v423
        %v427 = vxor.u32 %v426, 2147483648
        %v428 = vsel %vm345, %v427, %v426
        %v429 = vsub.s32 4, %v405
        %v430 = vsel %vm345, %v429, %v405
        %v431 = vsel %vm344, %v342, %v428
        %v432 = vsel %vm344, 0, %v430
        %v433 = vcosq.f32.pop %v431
        %v434 = vsinq.f32.pop %v431
        %vm435 = vweird.f32 %v342
        %v436 = vand.u32 %v432, 3
        %vm437 = vcmp.lt.s32.totalorder %v436, 2
        %vm438 = vcmp.eq.s32.totalorder %v436, 0
        %v439 = vxor.u32 %v434, 2147483648
        %v440 = vsel %vm438, %v433, %v439
        %vm441 = vcmp.eq.s32.totalorder %v436, 2
        %v442 = vxor.u32 %v433, 2147483648
        %v443 = vsel %vm441, %v442, %v434
        %v444 = vsel %vm437, %v440, %v443
        %v445 = vsel %vm435, nan, %v444
        %v446 = vmul.f32 %v445, %v445
        %v447 = vand.u32 2147483647, %v341
        %vm448 = vcmp.lt.f32.partialorder %v447, 1.0
        %v449 = vsel %vm448, %v446, 0.0
        %vm450 = vcmask 64512
        %451 = vst.msk [vmem:[#allocation2] sm:$0xff] %vm450, %v449
        %v452 = vsub.f32 1.0, %v446
        %v453 = vsub.f32 %v341, 1.0
        %v454 = vand.u32 2147483647, %v453
        %vm455 = vcmp.lt.f32.partialorder %v454, 1.0
        %v456 = vsel %vm455, %v452, 0.0
        %s457 = scalar_lea.vmem [#allocation2], 8
        %458 = vst.msk [vmem:[%s457] sm:$0xff] %vm450, %v456
        %v459 = vsub.f32 %v341, 2.0
        %v460 = vand.u32 2147483647, %v459
        %vm461 = vcmp.lt.f32.partialorder %v460, 1.0
        %v462 = vsel %vm461, %v446, 0.0
        %s463 = scalar_lea.vmem [#allocation2], 16
        %464 = vst.msk [vmem:[%s463] sm:$0xff] %vm450, %v462
        %v465 = vsub.f32 %v341, 3.0
        %v466 = vand.u32 2147483647, %v465
        %vm467 = vcmp.lt.f32.partialorder %v466, 1.0
        %v468 = vsel %vm467, %v452, 0.0
        %s469 = scalar_lea.vmem [#allocation2], 24
        %470 = vst.msk [vmem:[%s469] sm:$0xff] %vm450, %v468
        %v471 = vsub.f32 %v341, 4.0
        %v472 = vand.u32 2147483647, %v471
        %vm473 = vcmp.lt.f32.partialorder %v472, 1.0
        %v474 = vsel %vm473, %v446, 0.0
        %s475 = scalar_lea.vmem [#allocation2], 32
        %476 = vst.msk [vmem:[%s475] sm:$0xff] %vm450, %v474
        %v477 = vsub.f32 %v341, 5.0
        %v478 = vand.u32 2147483647, %v477
        %vm479 = vcmp.lt.f32.partialorder %v478, 1.0
        %v480 = vsel %vm479, %v452, 0.0
        %s481 = scalar_lea.vmem [#allocation2], 40
        %482 = vst.msk [vmem:[%s481] sm:$0xff] %vm450, %v480
        %v483 = vsub.f32 %v341, 6.0
        %v484 = vand.u32 2147483647, %v483
        %vm485 = vcmp.lt.f32.partialorder %v484, 1.0
        %v486 = vsel %vm485, %v446, 0.0
        %s487 = scalar_lea.vmem [#allocation2], 48
        %488 = vst.msk [vmem:[%s487] sm:$0xff] %vm450, %v486
        %v489 = vsub.f32 %v341, 7.0
        %v490 = vand.u32 2147483647, %v489
        %vm491 = vcmp.lt.f32.partialorder %v490, 1.0
        %v492 = vsel %vm491, %v452, 0.0
        %s493 = scalar_lea.vmem [#allocation2], 56
        %494 = vst.msk [vmem:[%s493] sm:$0xff] %vm450, %v492
        loop: start=0, step=1, limit=32
        $region45: #{decoder_forward.3} parent=35 // loop_pre_header
          _
        $region46: #{decoder_forward.3} parent=35 // loop_header
          %s496 = sphi 0, %s500
          %p497 = scmp.ge.s32.totalorder %s496, 32
        $region47: #{decoder_forward.3} parent=35 // loop_header_branch
          %499 = sbr.rel (%p497) target = $region51
        $region48: #{decoder_forward.3} parent=35 // loop_body
          loop: start=0, step=1, limit=8
          $region52: #{decoder_forward.3} parent=48 // loop_pre_header
            _
          $region53: #{decoder_forward.3} parent=48 // loop_header
            %s502 = sphi 0, %s506
            %p503 = scmp.ge.s32.totalorder %s502, 8
            %v507 = vphi 0.0, %v521
          $region54: #{decoder_forward.3} parent=48 // loop_header_branch
            %505 = sbr.rel (%p503) target = $region58
          $region55: #{decoder_forward.3} parent=48 // loop_body
            %s508 = smul.u32 %s502, 8
            %s509 = scalar_lea.vmem [#allocation2], %s508
            %v510 = vld [vmem:[%s509] sm:$0xff]
            %s511 = sshra.s32 %s496, 7
            %s512 = sand.u32 %s496, 127
            %s513 = sadd.s32 %s511, %s502
            %s514 = smul.u32 %s513, 128
            %s515 = sshra.s32 %s496, 7
            %s516 = sand.u32 %s496, 127
            %s517 = sadd.s32 %s514, %s516
            %s518 = sld [smem:[#allocation4 + %s517]]
            %v519 = vstv %s518
            %v520 = vmul.f32 %v510, %v519
            %v521 = vadd.f32 %v507, %v520
          $region56: #{decoder_forward.3} parent=48 // loop_footer
            %s506 = sadd.s32 1, %s502
          $region57: #{decoder_forward.3} parent=48 // loop_footer_branch
            %501 = sbr.rel target = $region53
          $region58: #{decoder_forward.3} parent=48 // loop_exit
            _
          %v522 = vmax.f32 %v507, 0.0
          %s523 = smul.u32 %s496, 8
          %s524 = scalar_lea.vmem %s285, %s523
          %v525 = vld [vmem:[%s524] sm:$0xff]
          %v526 = vld [vmem:[#allocation3] sm:$0xff]
          %v528 = vsel %vm450, %v525, 0
          %530 = vmatprep.subr.mxu0 0.0
          %531 = vmatpush1.msra.mxu0 %v522
          %532 = vmatprep.subr.mxu0 0.0
          %533 = vmatpush1.msra.mxu0 0.0
          %534 = vmatprep.subr.mxu0 0.0
          %535 = vmatpush1.msra.mxu0 0.0
          %536 = vmatprep.subr.mxu0 0.0
          %537 = vmatpush1.msra.mxu0 0.0
          %538 = vmatprep.subr.mxu0 0.0
          %539 = vmatpush1.msra.mxu0 0.0
          %540 = vmatprep.subr.mxu0 0.0
          %541 = vmatpush1.msra.mxu0 0.0
          %542 = vmatprep.subr.mxu0 0.0
          %543 = vmatpush1.msra.mxu0 0.0
          %544 = vmatprep.subr.mxu0 0.0
          %545 = vmatpush1.msra.mxu0 0.0
          %546 = vmatprep.subr.mxu0 0.0
          %547 = vmatpush1.msra.mxu0 0.0
          %548 = vmatprep.subr.mxu0 0.0
          %549 = vmatpush1.msra.mxu0 0.0
          %550 = vmatprep.subr.mxu0 0.0
          %551 = vmatpush1.msra.mxu0 0.0
          %552 = vmatprep.subr.mxu0 0.0
          %553 = vmatpush1.msra.mxu0 0.0
          %554 = vmatprep.subr.mxu0 0.0
          %555 = vmatpush1.msra.mxu0 0.0
          %556 = vmatprep.subr.mxu0 0.0
          %557 = vmatpush1.msra.mxu0 0.0
          %558 = vmatprep.subr.mxu0 0.0
          %559 = vmatpush1.msra.mxu0 0.0
          %560 = vmatprep.subr.mxu0 0.0
          %561 = vmatpush1.msra.mxu0 0.0
          %562 = vmatprep.subr.mxu0 0.0
          %563 = vmatpush1.msra.mxu0 0.0
          %564 = vmatprep.subr.mxu0 0.0
          %565 = vmatpush1.msra.mxu0 0.0
          %566 = vmatprep.subr.mxu0 0.0
          %567 = vmatpush1.msra.mxu0 0.0
          %568 = vmatprep.subr.mxu0 0.0
          %569 = vmatpush1.msra.mxu0 0.0
          %570 = vmatprep.subr.mxu0 0.0
          %571 = vmatpush1.msra.mxu0 0.0
          %572 = vmatprep.subr.mxu0 0.0
          %573 = vmatpush1.msra.mxu0 0.0
          %574 = vmatprep.subr.mxu0 0.0
          %575 = vmatpush1.msra.mxu0 0.0
          %576 = vmatprep.subr.mxu0 0.0
          %577 = vmatpush1.msra.mxu0 0.0
          %578 = vmatprep.subr.mxu0 0.0
          %579 = vmatpush1.msra.mxu0 0.0
          %580 = vmatprep.subr.mxu0 0.0
          %581 = vmatpush1.msra.mxu0 0.0
          %582 = vmatprep.subr.mxu0 0.0
          %583 = vmatpush1.msra.mxu0 0.0
          %584 = vmatprep.subr.mxu0 0.0
          %585 = vmatpush1.msra.mxu0 0.0
          %586 = vmatprep.subr.mxu0 0.0
          %587 = vmatpush1.msra.mxu0 0.0
          %588 = vmatprep.subr.mxu0 0.0
          %589 = vmatpush1.msra.mxu0 0.0
          %590 = vmatprep.subr.mxu0 0.0
          %591 = vmatpush1.msra.mxu0 0.0
          %592 = vmatprep.subr.mxu0 0.0
          %593 = vmatpush1.msra.mxu0 0.0
          %594 = vmatprep.mubr.f32.mxu0 0.0
          %595 = vmatmul.mubr.f32.gmra.mrb[0].mxu0 %v528
          %v596 = vpop.f32.mrb[0].mxu0
          %v597 = vadd.f32 0.0, %v596
          %v598 = vpop.f32.mrb[0].mxu0
          %599 = vdwg.mxu0
          %v600 = vadd.f32 %v526, %v597
          %601 = vst.msk [vmem:[#allocation3] sm:$0xff] %vm450, %v600
        $region49: #{decoder_forward.3} parent=35 // loop_footer
          %s500 = sadd.s32 1, %s496
        $region50: #{decoder_forward.3} parent=35 // loop_footer_branch
          %495 = sbr.rel target = $region46
        $region51: #{decoder_forward.3} parent=35 // loop_exit
          _
        // Predicated region
        $region59: #{decoder_forward.3} parent=35 // pred_check
          %p602 = pneg %p293
        $region60: #{decoder_forward.3} parent=35 // pred_check_branch
          %604 = sbr.rel (%p602) target = $region62
        $region61: #{decoder_forward.3} parent=35 // pred_region
          %v605 = vld [vmem:[#allocation3] sm:$0xff]
          %v606 = vmax.f32 %v605, 0.0
          %607 = vst.msk [vmem:[%s292] sm:$0xff] %vm450, %v606
        $region62: #{decoder_forward.3} parent=35 // pred_fallthru
          _
        %p608 = scmp.lt.s32.totalorder %s21, 1
        %s609 = scalar_select %p608, %s21, 1
        %p610 = scmp.lt.s32.totalorder %s22, 0
        %s611 = scalar_select %p610, %s22, 0
        %s612 = sadd.s32 %s611, %s609
        %s613 = smul.addr %s612, 8
        %s614 = scalar_lea.vmem %s4, %s613
        // Predicated region
        $region63: #{decoder_forward.3} parent=35 // pred_check
          %p615 = pneg %p158
        $region64: #{decoder_forward.3} parent=35 // pred_check_branch
          %617 = sbr.rel (%p615) target = $region66
        $region65: #{decoder_forward.3} parent=35 // pred_region
          _
        $region66: #{decoder_forward.3} parent=35 // pred_fallthru
          _
      $region36: #{decoder_forward.3} parent=5 // pred_fallthru
        _
      %p618 = scmp.le.s32.totalorder 2, %s11
      // Predicated region
      $region67: #{decoder_forward.3} parent=5 // pred_check
        %p619 = pneg %p618
      $region68: #{decoder_forward.3} parent=5 // pred_check_branch
        %621 = sbr.rel (%p619) target = $region70
      $region69: #{decoder_forward.3} parent=5 // pred_region
        %s622 = ssub.s32 %s11, 2
        // Predicated region
        $region71: #{decoder_forward.3} parent=69 // pred_check
          %p623 = pneg %p164
        $region72: #{decoder_forward.3} parent=69 // pred_check_branch
          %625 = sbr.rel (%p623) target = $region74
        $region73: #{decoder_forward.3} parent=69 // pred_region
          %p626 = scmp.lt.s32.totalorder %s24, 1
          %s627 = scalar_select %p626, %s24, 1
          %p628 = scmp.lt.s32.totalorder %s25, 0
          %s629 = scalar_select %p628, %s25, 0
          %s630 = sadd.s32 %s629, %s627
          %s631 = smul.addr %s630, 8
          %s632 = scalar_lea.vmem %s4, %s631
        $region74: #{decoder_forward.3} parent=69 // pred_fallthru
          _
      $region70: #{decoder_forward.3} parent=5 // pred_fallthru
        _
    $region6: #{decoder_forward.3} parent=1 // loop_footer
      %s15 = sadd.s32 1, %s11
    $region7: #{decoder_forward.3} parent=1 // loop_footer_branch
      %10 = sbr.rel target = $region3
    $region8: #{decoder_forward.3} parent=1 // loop_exit
      _
    %633 = vsyncpa [#allocation5], 1
    %s634 = scalar_lea.sflag [#allocation5], 1
    %635 = vsyncpa %s634, 1

</llo_original>
